<compile_context>
chip_gen: v7x
topology: tpu7x:2x2x1
jax: 0.10.0
libtpu: 0.0.40
codegen_flags: <defaults>
</compile_context>

<pallas_src>
import functools

import jax
import jax.numpy as jnp
from jax import lax
from jax.experimental import pallas as pl
from jax.experimental.pallas import tpu as pltpu

_INV_SQRT2 = 0.7071067811865476
_LANE = 128


def _gelu_exact(h):
    # nn.GELU() default = exact erf formulation (kept exact; it now runs once
    # per element thanks to the h-cache).
    return 0.5 * h * (1.0 + lax.erf(h * _INV_SQRT2))


def _round_up(v, m):
    return (v + m - 1) // m * m


def _pad_to(a, shape):
    pads = [(0, s - d) for d, s in zip(a.shape, shape)]
    if all(p == (0, 0) for p in pads):
        return a
    return jnp.pad(a, pads)


def _vmem_budget_bytes(frac=0.7, fallback_capacity=64 * 1024 * 1024):
    """Generation-aware VMEM budget (~45 MiB on v7x, ~90 MiB on v5e/v6e)."""
    try:
        cap = int(pltpu.get_tpu_info().vmem_capacity_bytes)
    except Exception:  # conservative fallback (assume v7x-sized VMEM)
        cap = fallback_capacity
    return int(cap * frac)


def _pick_row_tile(hw, requested=None, *, max_rows=512, sublane=8):
    """Row tile: prefer multiples of 256 (v6e/v7x MXU M-tiles), then 128
    (v5e), then the sublane pack; the whole image if it is small enough."""
    if requested is not None:
        if hw % requested:
            raise ValueError(f"row_tile={requested} must divide HW={hw}")
        if requested != hw and requested % sublane:
            raise ValueError(
                f"row_tile={requested} must be a multiple of {sublane}")
        return requested
    if hw <= max_rows:
        return hw
    for mult in (256, 128, sublane):
        if mult > max_rows:
            continue
        t = (max_rows // mult) * mult
        while t >= mult:
            if hw % t == 0:
                return t
            t -= mult
    return hw  # fall back to whole-image rows


def _fam_stage1_kernel(x_ref, w1_ref, b1_ref, wc_ref, bc_ref, we_ref, be_ref,
                       w2_ref, b2_ref,
                       y_ref, bn_ref,
                       sum_h_ref, e_ref, h_cache_ref, x_cache_ref,
                       *, inv_hw, n_tiles, tile_rows, cache_h, mxu_dtype):
    """Grid = (image, pass, hw_tile).

    pass 0: proj_1 + exact GELU, SE pool accumulation, h/x cached in VMEM,
            SE MLP + sigmoid gate at the last tile of the image.
    pass 1: gate * h, proj_2, residual, y writeback, per-image BN partials.
    """
    p = pl.program_id(1)
    t = pl.program_id(2)

    def proj1(x_m):
        h = jnp.dot(x_m, w1_ref[...], preferred_element_type=jnp.float32)
        return _gelu_exact(h + b1_ref[...])                       # (T, Ca) f32

    @pl.when((p == 0) & (t == 0))
    def _init():                                     # per-image accumulators
        sum_h_ref[...] = jnp.zeros_like(sum_h_ref)
        bn_ref[...] = jnp.zeros_like(bn_ref)

    @pl.when(p == 0)
    def _pass0():
        x_tile = x_ref[...]                                       # (T, Cm)
        x_m = x_tile if x_tile.dtype == mxu_dtype else x_tile.astype(mxu_dtype)
        h = proj1(x_m)
        sum_h_ref[...] += jnp.sum(h, axis=0, keepdims=True)       # SE pool
        if cache_h:
            r0 = pl.multiple_of(t * tile_rows, tile_rows)
            h_cache_ref[pl.ds(r0, tile_rows), :] = h.astype(h_cache_ref.dtype)
            x_cache_ref[pl.ds(r0, tile_rows), :] = x_tile

    @pl.when((p == 0) & (t == n_tiles - 1))
    def _se_gate():
        # Tiny SE MLP on the pooled per-image mean (kept in f32).
        s = sum_h_ref[...] * inv_hw                               # (1, Ca)
        c = jnp.dot(s, wc_ref[...], preferred_element_type=jnp.float32)
        c = jnp.maximum(c + bc_ref[...], 0.0)                     # ReLU
        g = jnp.dot(c, we_ref[...], preferred_element_type=jnp.float32)
        e_ref[...] = jax.nn.sigmoid(g + be_ref[...])              # (1, Ca)

    @pl.when(p == 1)
    def _pass1():
        if cache_h:
            r0 = pl.multiple_of(t * tile_rows, tile_rows)
            h = h_cache_ref[pl.ds(r0, tile_rows), :].astype(jnp.float32)
            x_res = x_cache_ref[pl.ds(r0, tile_rows), :].astype(jnp.float32)
        else:
            # Fallback for images whose h/x cache would not fit VMEM:
            # re-stream x and recompute proj_1 + GELU.
            x_tile = x_ref[...]
            x_m = (x_tile if x_tile.dtype == mxu_dtype
                   else x_tile.astype(mxu_dtype))
            h = proj1(x_m)
            x_res = x_tile.astype(jnp.float32)
        hg = h * e_ref[...]                                       # SE gating
        hg_m = hg if hg.dtype == mxu_dtype else hg.astype(mxu_dtype)
        y = jnp.dot(hg_m, w2_ref[...], preferred_element_type=jnp.float32)
        y = y + b2_ref[...] + x_res                               # bias + residual
        y_ref[...] = y.astype(y_ref.dtype)
        # One-pass BN partial sums in f32 (taken before any bf16 cast of y).
        # NOTE: sum / sum-of-squares can cancel when |mean| >> std; acceptable
        # for near-zero-mean residual activations like these.
        bn_ref[0:1, :] += jnp.sum(y, axis=0, keepdims=True)
        bn_ref[1:2, :] += jnp.sum(y * y, axis=0, keepdims=True)
    # TODO(synk): BatchNorm2d running_mean/running_var buffer updates (a
    # training-time side effect, not part of the returned tensor) are not
    # emitted.


def _bn_apply_kernel(y_ref, stats_ref, o_ref):
    # stats row 0 = gamma*rstd, row 1 = beta - mu*gamma*rstd  ->  single FMA.
    y = y_ref[...].astype(jnp.float32)
    o_ref[...] = (y * stats_ref[0:1, :] + stats_ref[1:2, :]).astype(o_ref.dtype)


def fam_forward_nhwc(x_nhwc, params, *, eps=1e-5, row_tile=None,
                     mxu_dtype=jnp.bfloat16, y_dtype=None, cache_h=None,
                     pad_channels=True):
    """FAM forward on channels-last input (no layout transposes needed)."""
    N, H, W, Cm = x_nhwc.shape
    HW = H * W
    Ca = params["w1"].shape[1]
    Cmid = params["wc"].shape[1]

    mxu_dtype = jnp.dtype(mxu_dtype)
    out_dtype = jnp.dtype(x_nhwc.dtype)
    if y_dtype is None:
        y_dtype = out_dtype if mxu_dtype == jnp.dtype(jnp.float32) else mxu_dtype
    y_dtype = jnp.dtype(y_dtype)

    # Lane-dense channels: zero-pad Cm/Ca to multiples of 128.  The zero pads
    # are exact no-ops through GELU / SE / proj_2 / BN; padded lanes are
    # sliced off at the end.
    Cm_p = _round_up(Cm, _LANE) if pad_channels else Cm
    Ca_p = _round_up(Ca, _LANE) if pad_channels else Ca

    x = _pad_to(x_nhwc.reshape(N, HW, Cm), (N, HW, Cm_p))

    # Weights cast to the MXU feed dtype host-side (no per-step in-kernel
    # casts, halved resident weight VMEM on the bf16 path).
    w1 = _pad_to(params["w1"], (Cm_p, Ca_p)).astype(mxu_dtype)
    b1 = _pad_to(params["b1"], (1, Ca_p))
    wc = _pad_to(params["wc"], (Ca_p, Cmid))
    bc = params["bc"]
    we = _pad_to(params["we"], (Cmid, Ca_p))
    be = _pad_to(params["be"], (1, Ca_p))
    w2 = _pad_to(params["w2"], (Ca_p, Cm_p)).astype(mxu_dtype)
    b2 = _pad_to(params["b2"], (1, Cm_p))
    gamma = _pad_to(params["gamma"], (1, Cm_p))
    beta = _pad_to(params["beta"], (1, Cm_p))
    weights = (w1, b1, wc, bc, we, be, w2, b2)

    sublane = 16 if (x.dtype.itemsize == 2 or y_dtype.itemsize == 2) else 8
    T1 = _pick_row_tile(HW, row_tile, max_rows=512, sublane=sublane)
    n_tiles = HW // T1
    T2 = _pick_row_tile(HW, None, max_rows=1024, sublane=sublane)  # mem-bound

    # VMEM budget gates the per-image h/x cache and sets the compiler limit.
    budget = _vmem_budget_bytes()
    weight_bytes = sum(int(a.size) * a.dtype.itemsize for a in weights)
    stream_bytes = 2 * T1 * Cm_p * (x.dtype.itemsize + y_dtype.itemsize)
    cache_bytes = HW * Ca_p * mxu_dtype.itemsize + HW * Cm_p * x.dtype.itemsize
    if cache_h is None:
        cache_h = weight_bytes + stream_bytes + cache_bytes + (2 << 20) <= budget
    cache_h = bool(cache_h)
    vmem_limit = int(budget)

    h_cache_shape = (HW, Ca_p) if cache_h else (8, _LANE)
    x_cache_shape = (HW, Cm_p) if cache_h else (8, _LANE)
    if cache_h:
        # Pass 1 reuses the VMEM cache: pin x's block so it is not re-read.
        x_map = lambda n, p, t: (n, t * (1 - p), 0)
    else:
        x_map = lambda n, p, t: (n, t, 0)

    vmem = pl.BlockSpec(memory_space=pltpu.MemorySpace.VMEM)

    x_reads = 1 if cache_h else 2
    proj_passes = 1 if cache_h else 2
    cost1 = pl.CostEstimate(
        flops=2 * N * HW * Cm_p * Ca_p * (proj_passes + 1) + 4 * N * Ca_p * Cmid,
        transcendentals=N * HW * Ca_p * proj_passes + N * Ca_p,
        bytes_accessed=(x_reads * N * HW * Cm_p * x.dtype.itemsize
                        + N * HW * Cm_p * y_dtype.itemsize + weight_bytes))

    kernel1 = functools.partial(
        _fam_stage1_kernel, inv_hw=1.0 / HW, n_tiles=n_tiles, tile_rows=T1,
        cache_h=cache_h, mxu_dtype=mxu_dtype)

    y, bn = pl.pallas_call(
        kernel1,
        out_shape=(jax.ShapeDtypeStruct((N, HW, Cm_p), y_dtype),
                   jax.ShapeDtypeStruct((N, 2, Cm_p), jnp.float32)),
        grid_spec=pltpu.PrefetchScalarGridSpec(
            num_scalar_prefetch=0,
            grid=(N, 2, n_tiles),
            in_specs=[pl.BlockSpec((None, T1, Cm_p), x_map)] + [vmem] * 8,
            out_specs=(
                # During pass 0 the y block index is pinned at (n, 0); it is
                # first written (in full) at the first pass-1 step, so every
                # flush carries valid data (also holds for n_tiles == 1).
                pl.BlockSpec((None, T1, Cm_p), lambda n, p, t: (n, t * p, 0)),
                # Per-image BN partial sums stay resident for the whole image.
                pl.BlockSpec((None, 2, Cm_p), lambda n, p, t: (n, 0, 0)),
            ),
            scratch_shapes=[
                pltpu.VMEM((1, Ca_p), jnp.float32),     # per-image Sum_HW(h)
                pltpu.VMEM((1, Ca_p), jnp.float32),     # SE sigmoid gate e
                pltpu.VMEM(h_cache_shape, mxu_dtype),   # h = GELU(x@w1+b1)
                pltpu.VMEM(x_cache_shape, x.dtype),     # x (for the residual)
            ]),
        compiler_params=pltpu.CompilerParams(
            # Images are independent up to the BN finalize (done outside the
            # kernel), so the image axis can split across TensorCores (v7x).
            dimension_semantics=("parallel", "arbitrary", "arbitrary"),
            vmem_limit_bytes=vmem_limit),
        cost_estimate=cost1,
    )(x, *weights)

    # Finalize BN batch stats (tiny per-channel epilogue) and fold gamma/beta
    # into scale/shift so the apply pass is a single FMA per element.
    inv_nhw = 1.0 / (N * HW)
    mu = jnp.sum(bn[:, 0, :], axis=0) * inv_nhw
    var = jnp.maximum(jnp.sum(bn[:, 1, :], axis=0) * inv_nhw - mu * mu, 0.0)
    rstd = lax.rsqrt(var + eps)
    scale = rstd * gamma[0]
    shift = beta[0] - mu * scale
    stats = jnp.stack([scale, shift], axis=0)                      # (2, Cm_p)

    cost2 = pl.CostEstimate(
        flops=2 * N * HW * Cm_p, transcendentals=0,
        bytes_accessed=N * HW * Cm_p * (y_dtype.itemsize + out_dtype.itemsize))

    out = pl.pallas_call(
        _bn_apply_kernel,
        out_shape=jax.ShapeDtypeStruct((N, HW, Cm_p), out_dtype),
        grid_spec=pltpu.PrefetchScalarGridSpec(
            num_scalar_prefetch=0,
            grid=(N, HW // T2),
            in_specs=[pl.BlockSpec((None, T2, Cm_p), lambda n, t: (n, t, 0)),
                      vmem],
            out_specs=pl.BlockSpec((None, T2, Cm_p), lambda n, t: (n, t, 0))),
        compiler_params=pltpu.CompilerParams(
            dimension_semantics=("parallel", "parallel"),
            vmem_limit_bytes=vmem_limit),
        cost_estimate=cost2,
        # Normalize in place when y and the output share a dtype (f32 path).
        input_output_aliases=({0: 0} if y_dtype == out_dtype else {}),
    )(y, stats)

    if Cm_p != Cm:
        out = out[:, :, :Cm]
    return out.reshape(N, H, W, Cm)


def fam_forward(x_nchw, params, **kwargs):
    """NCHW adapter matching the PyTorch module interface.

    Note: in a real channels-last pipeline call fam_forward_nhwc directly and
    skip these two full-activation HBM transposes.
    """
    out = fam_forward_nhwc(jnp.transpose(x_nchw, (0, 2, 3, 1)), params, **kwargs)
    return jnp.transpose(out, (0, 3, 1, 2))


def fam_reference(x_nchw, params, eps=1e-5):
    """Pure-JAX reference (mirrors the PyTorch forward) for verification."""
    x = jnp.transpose(x_nchw, (0, 2, 3, 1)).astype(jnp.float32)  # NHWC
    h = jnp.einsum("nhwc,cd->nhwd", x, params["w1"]) + params["b1"][0]
    h = 0.5 * h * (1.0 + jax.scipy.special.erf(h * _INV_SQRT2))
    s = jnp.mean(h, axis=(1, 2))
    c = jnp.maximum(s @ params["wc"] + params["bc"][0], 0.0)
    e = jax.nn.sigmoid(c @ params["we"] + params["be"][0])
    h = h * e[:, None, None, :]
    y = jnp.einsum("nhwd,dc->nhwc", h, params["w2"]) + params["b2"][0]
    y = y + x
    mu = jnp.mean(y, axis=(0, 1, 2), keepdims=True)
    var = jnp.mean((y - mu) ** 2, axis=(0, 1, 2), keepdims=True)
    yn = (y - mu) / jnp.sqrt(var + eps)
    out = yn * params["gamma"][0] + params["beta"][0]
    return jnp.transpose(out, (0, 3, 1, 2))


def make_params(key, d_model, d_atten):
    d_mid = d_atten // 4
    ks = jax.random.split(key, 8)
    f = lambda k, shape: (jax.random.normal(k, shape, jnp.float32) * 0.1)
    # 1x1 conv weights stored already transposed: (in_channels, out_channels)
    return {
        "w1": f(ks[0], (d_model, d_atten)),
        "b1": f(ks[1], (1, d_atten)),
        "wc": f(ks[2], (d_atten, d_mid)),
        "bc": f(ks[3], (1, d_mid)),
        "we": f(ks[4], (d_mid, d_atten)),
        "be": f(ks[5], (1, d_atten)),
        "w2": f(ks[6], (d_atten, d_model)),
        "b2": f(ks[7], (1, d_model)),
        "gamma": jnp.ones((1, d_model), jnp.float32),   # BatchNorm default init
        "beta": jnp.zeros((1, d_model), jnp.float32),
    }


if __name__ == "__main__":
    d_model, d_atten = 8, 16
    N, H, W = 2, 16, 16

    key = jax.random.PRNGKey(0)
    kx, kp = jax.random.split(key)
    x = jax.random.normal(kx, (N, d_model, H, W), jnp.float32)
    params = make_params(kp, d_model, d_atten)

    ref = jax.block_until_ready(fam_reference(x, params))

    # Exact-parity path (f32 MXU feed, f32 y intermediate); 4 row tiles per
    # image exercise the pipelined per-image two-pass grid + h/x VMEM cache.
    out = jax.block_until_ready(
        fam_forward(x, params, row_tile=64, mxu_dtype=jnp.float32))
    assert out.shape == (N, d_model, H, W)
    assert jnp.allclose(out, ref, atol=1e-4, rtol=1e-4), (
        float(jnp.max(jnp.abs(out - ref))))

    # Recompute fallback path (what images that overflow the VMEM cache use).
    out_nc = jax.block_until_ready(
        fam_forward(x, params, row_tile=64, mxu_dtype=jnp.float32,
                    cache_h=False))
    assert jnp.allclose(out_nc, ref, atol=1e-4, rtol=1e-4), (
        float(jnp.max(jnp.abs(out_nc - ref))))

    # Throughput default: bf16 MXU feed (f32 accumulation) + bf16 y
    # intermediate round-trip.
    out_bf16 = jax.block_until_ready(fam_forward(x, params, row_tile=64))
    assert jnp.allclose(out_bf16, ref, atol=5e-2, rtol=5e-2), (
        float(jnp.max(jnp.abs(out_bf16 - ref))))

    print("KERNEL_OK")
</pallas_src>

<mosaic_0001>
module attributes {stable_mosaic.version = 11 : i64} {
  func.func @_fam_stage1_kernel(%arg0: i32, %arg1: i32, %arg2: i32, %arg3: memref<1x64x128xf32, #tpu.memory_space<vmem>>, %arg4: memref<128x128xf32, #tpu.memory_space<vmem>>, %arg5: memref<1x128xf32, #tpu.memory_space<vmem>>, %arg6: memref<128x4xf32, #tpu.memory_space<vmem>>, %arg7: memref<1x4xf32, #tpu.memory_space<vmem>>, %arg8: memref<4x128xf32, #tpu.memory_space<vmem>>, %arg9: memref<1x128xf32, #tpu.memory_space<vmem>>, %arg10: memref<128x128xf32, #tpu.memory_space<vmem>>, %arg11: memref<1x128xf32, #tpu.memory_space<vmem>>, %arg12: memref<1x64x128xf32, #tpu.memory_space<vmem>>, %arg13: memref<1x2x128xf32, #tpu.memory_space<vmem>>, %arg14: memref<1x128xf32, #tpu.memory_space<vmem>>, %arg15: memref<1x128xf32, #tpu.memory_space<vmem>>, %arg16: memref<256x128xf32, #tpu.memory_space<vmem>>, %arg17: memref<256x128xf32, #tpu.memory_space<vmem>>) attributes {dimension_semantics = [#tpu.dimension_semantics<parallel>, #tpu.dimension_semantics<arbitrary>, #tpu.dimension_semantics<arbitrary>], iteration_bounds = array<i64: 2, 2, 4>, scalar_prefetch = 0 : i64, scratch_operands = 4 : i64, tpu.core_type = #tpu.core_type<tc>, window_params = [{transform_indices = @transform_0, window_bounds = array<i64: 1, 64, 128>}, {pipeline_mode = #tpu.pipeline_mode<synchronous>, transform_indices = @transform_1, window_bounds = array<i64: 128, 128>}, {pipeline_mode = #tpu.pipeline_mode<synchronous>, transform_indices = @transform_2, window_bounds = array<i64: 1, 128>}, {pipeline_mode = #tpu.pipeline_mode<synchronous>, transform_indices = @transform_3, window_bounds = array<i64: 128, 4>}, {pipeline_mode = #tpu.pipeline_mode<synchronous>, transform_indices = @transform_4, window_bounds = array<i64: 1, 4>}, {pipeline_mode = #tpu.pipeline_mode<synchronous>, transform_indices = @transform_5, window_bounds = array<i64: 4, 128>}, {pipeline_mode = #tpu.pipeline_mode<synchronous>, transform_indices = @transform_6, window_bounds = array<i64: 1, 128>}, {pipeline_mode = #tpu.pipeline_mode<synchronous>, transform_indices = @transform_7, window_bounds = array<i64: 128, 128>}, {pipeline_mode = #tpu.pipeline_mode<synchronous>, transform_indices = @transform_8, window_bounds = array<i64: 1, 128>}, {transform_indices = @transform_9, window_bounds = array<i64: 1, 64, 128>}, {transform_indices = @transform_10, window_bounds = array<i64: 1, 2, 128>}]} {
    %c0_i32 = arith.constant 0 : i32
    %0 = arith.cmpi eq, %arg1, %c0_i32 : i32
    %c0_i32_0 = arith.constant 0 : i32
    %1 = arith.cmpi eq, %arg2, %c0_i32_0 : i32
    %2 = arith.andi %0, %1 : i1
    %3 = arith.extui %2 : i1 to i32
    %c0_i32_1 = arith.constant 0 : i32
    %4 = arith.cmpi ne, %3, %c0_i32_1 : i32
    scf.if %4 {
      %cst = arith.constant 0.000000e+00 : f32
      %16 = vector.broadcast %cst : f32 to vector<1x128xf32>
      %c0 = arith.constant 0 : index
      %c0_7 = arith.constant 0 : index
      %17 = vector.load %arg14[%c0, %c0_7] : memref<1x128xf32, #tpu.memory_space<vmem>>, vector<1x128xf32>
      tpu.vector_store %arg14[%c0, %c0_7], %16 {strides = array<i32>} : memref<1x128xf32, #tpu.memory_space<vmem>>, vector<1x128xf32>,
      %cst_8 = arith.constant 0.000000e+00 : f32
      %18 = vector.broadcast %cst_8 : f32 to vector<2x128xf32>
      %c0_9 = arith.constant 0 : index
      %c0_10 = arith.constant 0 : index
      %c0_11 = arith.constant 0 : index
      %19 = vector.load %arg13[%c0_9, %c0_10, %c0_11] : memref<1x2x128xf32, #tpu.memory_space<vmem>>, vector<1x2x128xf32>
      %20 = vector.shape_cast %19 : vector<1x2x128xf32> to vector<2x128xf32>
      %21 = vector.shape_cast %18 : vector<2x128xf32> to vector<1x2x128xf32>
      tpu.vector_store %arg13[%c0_9, %c0_10, %c0_11], %21 {strides = array<i32>} : memref<1x2x128xf32, #tpu.memory_space<vmem>>, vector<1x2x128xf32>,
    } else {
    }
    %c0_i32_2 = arith.constant 0 : i32
    %5 = arith.cmpi eq, %arg1, %c0_i32_2 : i32
    %6 = arith.extui %5 : i1 to i32
    %c0_i32_3 = arith.constant 0 : i32
    %7 = arith.cmpi ne, %6, %c0_i32_3 : i32
    scf.if %7 {
      %c0 = arith.constant 0 : index
      %c0_7 = arith.constant 0 : index
      %c0_8 = arith.constant 0 : index
      %16 = vector.load %arg3[%c0, %c0_7, %c0_8] : memref<1x64x128xf32, #tpu.memory_space<vmem>>, vector<1x64x128xf32>
      %17 = vector.shape_cast %16 : vector<1x64x128xf32> to vector<64x128xf32>
      %c0_9 = arith.constant 0 : index
      %c0_10 = arith.constant 0 : index
      %18 = vector.load %arg4[%c0_9, %c0_10] : memref<128x128xf32, #tpu.memory_space<vmem>>, vector<128x128xf32>
      %cst = arith.constant dense<0.000000e+00> : vector<64x128xf32>
      %19 = tpu.matmul %17, %18, %cst {dimension_numbers = #tpu.dot_dimension_numbers<[1], [0], [0], [1], [0, 0, 1, 1], [], []>} : vector<64x128xf32>, vector<128x128xf32>, vector<64x128xf32> -> vector<64x128xf32>
      %c0_11 = arith.constant 0 : index
      %c0_12 = arith.constant 0 : index
      %20 = vector.load %arg5[%c0_11, %c0_12] : memref<1x128xf32, #tpu.memory_space<vmem>>, vector<1x128xf32>
      %21 = vector.broadcast %20 : vector<1x128xf32> to vector<64x128xf32>
      %22 = arith.addf %19, %21 : vector<64x128xf32>
      %cst_13 = arith.constant 5.000000e-01 : f32
      %23 = vector.broadcast %cst_13 : f32 to vector<64x128xf32>
      %24 = arith.mulf %23, %22 : vector<64x128xf32>
      %cst_14 = arith.constant 0.707106769 : f32
      %25 = vector.broadcast %cst_14 : f32 to vector<64x128xf32>
      %26 = arith.mulf %22, %25 : vector<64x128xf32>
      %27 = math.erf %26 : vector<64x128xf32>
      %cst_15 = arith.constant 1.000000e+00 : f32
      %28 = vector.broadcast %cst_15 : f32 to vector<64x128xf32>
      %29 = arith.addf %28, %27 : vector<64x128xf32>
      %30 = arith.mulf %24, %29 : vector<64x128xf32>
      %c0_16 = arith.constant 0 : index
      %c0_17 = arith.constant 0 : index
      %31 = vector.load %arg14[%c0_16, %c0_17] : memref<1x128xf32, #tpu.memory_space<vmem>>, vector<1x128xf32>
      %cst_18 = arith.constant dense<0.000000e+00> : vector<128xf32>
      %32 = vector.multi_reduction <add>, %30, %cst_18 [0] : vector<64x128xf32> to vector<128xf32>
      %33 = vector.shape_cast %32 : vector<128xf32> to vector<1x128xf32>
      %34 = arith.addf %31, %33 : vector<1x128xf32>
      %c0_19 = arith.constant 0 : index
      %c0_20 = arith.constant 0 : index
      %35 = vector.load %arg14[%c0_19, %c0_20] : memref<1x128xf32, #tpu.memory_space<vmem>>, vector<1x128xf32>
      tpu.vector_store %arg14[%c0_19, %c0_20], %34 {strides = array<i32>} : memref<1x128xf32, #tpu.memory_space<vmem>>, vector<1x128xf32>,
      %c64_i32 = arith.constant 64 : i32
      %36 = arith.muli %arg2, %c64_i32 : i32
      %37 = tpu.assume_multiple %36, 64 : i32
      %38 = arith.index_cast %37 : i32 to index
      %c0_21 = arith.constant 0 : index
      %39 = vector.load %arg16[%38, %c0_21] : memref<256x128xf32, #tpu.memory_space<vmem>>, vector<64x128xf32>
      tpu.vector_store %arg16[%38, %c0_21], %30 {strides = array<i32>} : memref<256x128xf32, #tpu.memory_space<vmem>>, vector<64x128xf32>,
      %40 = arith.index_cast %37 : i32 to index
      %c0_22 = arith.constant 0 : index
      %41 = vector.load %arg17[%40, %c0_22] : memref<256x128xf32, #tpu.memory_space<vmem>>, vector<64x128xf32>
      tpu.vector_store %arg17[%40, %c0_22], %17 {strides = array<i32>} : memref<256x128xf32, #tpu.memory_space<vmem>>, vector<64x128xf32>,
    } else {
    }
    %c0_i32_4 = arith.constant 0 : i32
    %8 = arith.cmpi eq, %arg1, %c0_i32_4 : i32
    %c3_i32 = arith.constant 3 : i32
    %9 = arith.cmpi eq, %arg2, %c3_i32 : i32
    %10 = arith.andi %8, %9 : i1
    %11 = arith.extui %10 : i1 to i32
    %c0_i32_5 = arith.constant 0 : i32
    %12 = arith.cmpi ne, %11, %c0_i32_5 : i32
    scf.if %12 {
      %c0 = arith.constant 0 : index
      %c0_7 = arith.constant 0 : index
      %16 = vector.load %arg14[%c0, %c0_7] : memref<1x128xf32, #tpu.memory_space<vmem>>, vector<1x128xf32>
      %cst = arith.constant 3.906250e-03 : f32
      %17 = vector.broadcast %cst : f32 to vector<1x128xf32>
      %18 = arith.mulf %16, %17 : vector<1x128xf32>
      %c0_8 = arith.constant 0 : index
      %c0_9 = arith.constant 0 : index
      %19 = vector.load %arg6[%c0_8, %c0_9] : memref<128x4xf32, #tpu.memory_space<vmem>>, vector<128x4xf32>
      %cst_10 = arith.constant dense<0.000000e+00> : vector<1x4xf32>
      %20 = tpu.matmul %18, %19, %cst_10 {dimension_numbers = #tpu.dot_dimension_numbers<[1], [0], [0], [1], [0, 0, 1, 1], [], []>} : vector<1x128xf32>, vector<128x4xf32>, vector<1x4xf32> -> vector<1x4xf32>
      %c0_11 = arith.constant 0 : index
      %c0_12 = arith.constant 0 : index
      %21 = vector.load %arg7[%c0_11, %c0_12] : memref<1x4xf32, #tpu.memory_space<vmem>>, vector<1x4xf32>
      %22 = arith.addf %20, %21 : vector<1x4xf32>
      %cst_13 = arith.constant 0.000000e+00 : f32
      %23 = vector.broadcast %cst_13 : f32 to vector<1x4xf32>
      %24 = arith.maximumf %22, %23 : vector<1x4xf32>
      %c0_14 = arith.constant 0 : index
      %c0_15 = arith.constant 0 : index
      %25 = vector.load %arg8[%c0_14, %c0_15] : memref<4x128xf32, #tpu.memory_space<vmem>>, vector<4x128xf32>
      %cst_16 = arith.constant dense<0.000000e+00> : vector<1x128xf32>
      %26 = tpu.matmul %24, %25, %cst_16 {dimension_numbers = #tpu.dot_dimension_numbers<[1], [0], [0], [1], [0, 0, 1, 1], [], []>} : vector<1x4xf32>, vector<4x128xf32>, vector<1x128xf32> -> vector<1x128xf32>
      %c0_17 = arith.constant 0 : index
      %c0_18 = arith.constant 0 : index
      %27 = vector.load %arg9[%c0_17, %c0_18] : memref<1x128xf32, #tpu.memory_space<vmem>>, vector<1x128xf32>
      %28 = arith.addf %26, %27 : vector<1x128xf32>
      %29 = arith.negf %28 : vector<1x128xf32>
      %30 = math.exp %29 : vector<1x128xf32>
      %cst_19 = arith.constant 1.000000e+00 : f32
      %31 = vector.broadcast %cst_19 : f32 to vector<1x128xf32>
      %32 = arith.addf %31, %30 : vector<1x128xf32>
      %33 = arith.divf %31, %32 : vector<1x128xf32>
      %c0_20 = arith.constant 0 : index
      %c0_21 = arith.constant 0 : index
      %34 = vector.load %arg15[%c0_20, %c0_21] : memref<1x128xf32, #tpu.memory_space<vmem>>, vector<1x128xf32>
      tpu.vector_store %arg15[%c0_20, %c0_21], %33 {strides = array<i32>} : memref<1x128xf32, #tpu.memory_space<vmem>>, vector<1x128xf32>,
    } else {
    }
    %c1_i32 = arith.constant 1 : i32
    %13 = arith.cmpi eq, %arg1, %c1_i32 : i32
    %14 = arith.extui %13 : i1 to i32
    %c0_i32_6 = arith.constant 0 : i32
    %15 = arith.cmpi ne, %14, %c0_i32_6 : i32
    scf.if %15 {
      %c64_i32 = arith.constant 64 : i32
      %16 = arith.muli %arg2, %c64_i32 : i32
      %17 = tpu.assume_multiple %16, 64 : i32
      %18 = arith.index_cast %17 : i32 to index
      %c0 = arith.constant 0 : index
      %19 = vector.load %arg16[%18, %c0] : memref<256x128xf32, #tpu.memory_space<vmem>>, vector<64x128xf32>
      %20 = arith.index_cast %17 : i32 to index
      %c0_7 = arith.constant 0 : index
      %21 = vector.load %arg17[%20, %c0_7] : memref<256x128xf32, #tpu.memory_space<vmem>>, vector<64x128xf32>
      %c0_8 = arith.constant 0 : index
      %c0_9 = arith.constant 0 : index
      %22 = vector.load %arg15[%c0_8, %c0_9] : memref<1x128xf32, #tpu.memory_space<vmem>>, vector<1x128xf32>
      %23 = vector.broadcast %22 : vector<1x128xf32> to vector<64x128xf32>
      %24 = arith.mulf %19, %23 : vector<64x128xf32>
      %c0_10 = arith.constant 0 : index
      %c0_11 = arith.constant 0 : index
      %25 = vector.load %arg10[%c0_10, %c0_11] : memref<128x128xf32, #tpu.memory_space<vmem>>, vector<128x128xf32>
      %cst = arith.constant dense<0.000000e+00> : vector<64x128xf32>
      %26 = tpu.matmul %24, %25, %cst {dimension_numbers = #tpu.dot_dimension_numbers<[1], [0], [0], [1], [0, 0, 1, 1], [], []>} : vector<64x128xf32>, vector<128x128xf32>, vector<64x128xf32> -> vector<64x128xf32>
      %c0_12 = arith.constant 0 : index
      %c0_13 = arith.constant 0 : index
      %27 = vector.load %arg11[%c0_12, %c0_13] : memref<1x128xf32, #tpu.memory_space<vmem>>, vector<1x128xf32>
      %28 = vector.broadcast %27 : vector<1x128xf32> to vector<64x128xf32>
      %29 = arith.addf %26, %28 : vector<64x128xf32>
      %30 = arith.addf %29, %21 : vector<64x128xf32>
      %c0_14 = arith.constant 0 : index
      %c0_15 = arith.constant 0 : index
      %c0_16 = arith.constant 0 : index
      %31 = vector.load %arg12[%c0_14, %c0_15, %c0_16] : memref<1x64x128xf32, #tpu.memory_space<vmem>>, vector<1x64x128xf32>
      %32 = vector.shape_cast %31 : vector<1x64x128xf32> to vector<64x128xf32>
      %33 = vector.shape_cast %30 : vector<64x128xf32> to vector<1x64x128xf32>
      tpu.vector_store %arg12[%c0_14, %c0_15, %c0_16], %33 {strides = array<i32>} : memref<1x64x128xf32, #tpu.memory_space<vmem>>, vector<1x64x128xf32>,
      %c0_17 = arith.constant 0 : index
      %c0_18 = arith.constant 0 : index
      %c0_19 = arith.constant 0 : index
      %34 = vector.load %arg13[%c0_17, %c0_18, %c0_19] : memref<1x2x128xf32, #tpu.memory_space<vmem>>, vector<1x1x128xf32>
      %35 = vector.shape_cast %34 : vector<1x1x128xf32> to vector<1x128xf32>
      %cst_20 = arith.constant dense<0.000000e+00> : vector<128xf32>
      %36 = vector.multi_reduction <add>, %30, %cst_20 [0] : vector<64x128xf32> to vector<128xf32>
      %37 = vector.shape_cast %36 : vector<128xf32> to vector<1x128xf32>
      %38 = arith.addf %35, %37 : vector<1x128xf32>
      %c0_21 = arith.constant 0 : index
      %c0_22 = arith.constant 0 : index
      %c0_23 = arith.constant 0 : index
      %39 = vector.load %arg13[%c0_21, %c0_22, %c0_23] : memref<1x2x128xf32, #tpu.memory_space<vmem>>, vector<1x1x128xf32>
      %40 = vector.shape_cast %39 : vector<1x1x128xf32> to vector<1x128xf32>
      %41 = vector.shape_cast %38 : vector<1x128xf32> to vector<1x1x128xf32>
      tpu.vector_store %arg13[%c0_21, %c0_22, %c0_23], %41 {strides = array<i32>} : memref<1x2x128xf32, #tpu.memory_space<vmem>>, vector<1x1x128xf32>,
      %c0_24 = arith.constant 0 : index
      %c1 = arith.constant 1 : index
      %c0_25 = arith.constant 0 : index
      %42 = vector.load %arg13[%c0_24, %c1, %c0_25] : memref<1x2x128xf32, #tpu.memory_space<vmem>>, vector<1x1x128xf32>
      %43 = vector.shape_cast %42 : vector<1x1x128xf32> to vector<1x128xf32>
      %44 = arith.mulf %30, %30 : vector<64x128xf32>
      %cst_26 = arith.constant dense<0.000000e+00> : vector<128xf32>
      %45 = vector.multi_reduction <add>, %44, %cst_26 [0] : vector<64x128xf32> to vector<128xf32>
      %46 = vector.shape_cast %45 : vector<128xf32> to vector<1x128xf32>
      %47 = arith.addf %43, %46 : vector<1x128xf32>
      %c0_27 = arith.constant 0 : index
      %c1_28 = arith.constant 1 : index
      %c0_29 = arith.constant 0 : index
      %48 = vector.load %arg13[%c0_27, %c1_28, %c0_29] : memref<1x2x128xf32, #tpu.memory_space<vmem>>, vector<1x1x128xf32>
      %49 = vector.shape_cast %48 : vector<1x1x128xf32> to vector<1x128xf32>
      %50 = vector.shape_cast %47 : vector<1x128xf32> to vector<1x1x128xf32>
      tpu.vector_store %arg13[%c0_27, %c1_28, %c0_29], %50 {strides = array<i32>} : memref<1x2x128xf32, #tpu.memory_space<vmem>>, vector<1x1x128xf32>,
    } else {
    }
    return
  }
  func.func @transform_0(%arg0: i32, %arg1: i32, %arg2: i32) -> (i32, i32, i32) {
    %c1_i32 = arith.constant 1 : i32
    %0 = arith.subi %c1_i32, %arg1 : i32
    %1 = arith.muli %arg2, %0 : i32
    %c0_i32 = arith.constant 0 : i32
    %c0_i32_0 = arith.constant 0 : i32
    return %arg0, %1, %c0_i32 : i32, i32, i32
  }
  func.func @transform_1(%arg0: i32, %arg1: i32, %arg2: i32) -> (i32, i32) {
    %c0_i32 = arith.constant 0 : i32
    %c0_i32_0 = arith.constant 0 : i32
    %c0_i32_1 = arith.constant 0 : i32
    return %c0_i32, %c0_i32_0 : i32, i32
  }
  func.func @transform_2(%arg0: i32, %arg1: i32, %arg2: i32) -> (i32, i32) {
    %c0_i32 = arith.constant 0 : i32
    %c0_i32_0 = arith.constant 0 : i32
    %c0_i32_1 = arith.constant 0 : i32
    return %c0_i32, %c0_i32_0 : i32, i32
  }
  func.func @transform_3(%arg0: i32, %arg1: i32, %arg2: i32) -> (i32, i32) {
    %c0_i32 = arith.constant 0 : i32
    %c0_i32_0 = arith.constant 0 : i32
    %c0_i32_1 = arith.constant 0 : i32
    return %c0_i32, %c0_i32_0 : i32, i32
  }
  func.func @transform_4(%arg0: i32, %arg1: i32, %arg2: i32) -> (i32, i32) {
    %c0_i32 = arith.constant 0 : i32
    %c0_i32_0 = arith.constant 0 : i32
    %c0_i32_1 = arith.constant 0 : i32
    return %c0_i32, %c0_i32_0 : i32, i32
  }
  func.func @transform_5(%arg0: i32, %arg1: i32, %arg2: i32) -> (i32, i32) {
    %c0_i32 = arith.constant 0 : i32
    %c0_i32_0 = arith.constant 0 : i32
    %c0_i32_1 = arith.constant 0 : i32
    return %c0_i32, %c0_i32_0 : i32, i32
  }
  func.func @transform_6(%arg0: i32, %arg1: i32, %arg2: i32) -> (i32, i32) {
    %c0_i32 = arith.constant 0 : i32
    %c0_i32_0 = arith.constant 0 : i32
    %c0_i32_1 = arith.constant 0 : i32
    return %c0_i32, %c0_i32_0 : i32, i32
  }
  func.func @transform_7(%arg0: i32, %arg1: i32, %arg2: i32) -> (i32, i32) {
    %c0_i32 = arith.constant 0 : i32
    %c0_i32_0 = arith.constant 0 : i32
    %c0_i32_1 = arith.constant 0 : i32
    return %c0_i32, %c0_i32_0 : i32, i32
  }
  func.func @transform_8(%arg0: i32, %arg1: i32, %arg2: i32) -> (i32, i32) {
    %c0_i32 = arith.constant 0 : i32
    %c0_i32_0 = arith.constant 0 : i32
    %c0_i32_1 = arith.constant 0 : i32
    return %c0_i32, %c0_i32_0 : i32, i32
  }
  func.func @transform_9(%arg0: i32, %arg1: i32, %arg2: i32) -> (i32, i32, i32) {
    %0 = arith.muli %arg2, %arg1 : i32
    %c0_i32 = arith.constant 0 : i32
    %c0_i32_0 = arith.constant 0 : i32
    return %arg0, %0, %c0_i32 : i32, i32, i32
  }
  func.func @transform_10(%arg0: i32, %arg1: i32, %arg2: i32) -> (i32, i32, i32) {
    %c0_i32 = arith.constant 0 : i32
    %c0_i32_0 = arith.constant 0 : i32
    %c0_i32_1 = arith.constant 0 : i32
    return %arg0, %c0_i32, %c0_i32_0 : i32, i32, i32
  }
}

</mosaic_0001>

<llo_original>
// kernel: tpu_custom_call.1
$region0: #{tpu_custom_call.1}
  #allocation0 [shape = 'u32[]', space=smem, size = 0x4, offset = 0x4, fixed_abs, tag = 'smem constant byte address 0x4 - core index']
  #allocation1 [shape = 'u32[144,128]{1,0:T(1,128)}', space=vmem, size = 0x12000, scoped, tag = 'internal scratch']
  #allocation2 [shape = 'f32[1,128]{1,0:T(1,128)}', space=vmem, size = 0x200, scoped, tag = 'scratch operand']
  #allocation3 [shape = 'f32[1,128]{1,0:T(1,128)}', space=vmem, size = 0x200, scoped, tag = 'scratch operand']
  #allocation4 [shape = 'f32[256,128]{1,0:T(8,128)}', space=vmem, size = 0x20000, scoped, tag = 'scratch operand']
  #allocation5 [shape = 'f32[256,128]{1,0:T(8,128)}', space=vmem, size = 0x20000, scoped, tag = 'scratch operand']
  %s0 = inlined_call_operand.hbm [shape: f32[2,256,128], index: 0, kind: input, shape index: {}]
  %s1 = inlined_call_operand.vmem [shape: f32[128,128], index: 1, kind: input, shape index: {}]
  %s2 = inlined_call_operand.vmem [shape: f32[1,128], index: 2, kind: input, shape index: {}]
  %s3 = inlined_call_operand.vmem [shape: f32[128,4], index: 3, kind: input, shape index: {}]
  %s4 = inlined_call_operand.vmem [shape: f32[1,4], index: 4, kind: input, shape index: {}]
  %s5 = inlined_call_operand.vmem [shape: f32[4,128], index: 5, kind: input, shape index: {}]
  %s6 = inlined_call_operand.vmem [shape: f32[1,128], index: 6, kind: input, shape index: {}]
  %s7 = inlined_call_operand.hbm [shape: f32[128,128], index: 7, kind: input, shape index: {}]
  %s8 = inlined_call_operand.vmem [shape: f32[1,128], index: 8, kind: input, shape index: {}]
  %s9 = inlined_call_operand.hbm [shape: f32[2,256,128], index: 9, kind: output, shape index: {0}]
  %s10 = inlined_call_operand.hbm [shape: f32[2,2,128], index: 10, kind: output, shape index: {1}]
  %11 = xla_tuple %s9, %s10
  %s12 = sld [smem:[#allocation0]]
  $region101: #{tpu_custom_call.1} parent=0
    _
  %s14 = ssub.s32 1, %s12
  %s15 = scalar_select 0, %s14, %s12
  $region1: #{tpu_custom_call.1} parent=0
    #allocation6 [shape = 'u8[65536]{0}', space=vmem, size = 0x10000, scoped, tag = 'input window, operand 0']
    #allocation7 [shape = 's32[2]{0}', space=sflag, size = 0x8, scoped, tag = 'scoped memory for tpu_custom_call.1']
    #allocation8 [shape = 's32[2]{0}', space=sflag, size = 0x8, scoped, tag = 'scoped memory for tpu_custom_call.1']
    #allocation9 [shape = 'u8[65536]{0}', space=vmem, size = 0x10000, scoped, tag = 'input window, operand 7, single buffered']
    #allocation10 [shape = 's32[1]{0}', space=sflag, size = 0x4, scoped, tag = 'scoped memory for tpu_custom_call.1']
    #allocation11 [shape = 'u8[65536]{0}', space=vmem, size = 0x10000, scoped, tag = 'output window, operand 0']
    #allocation12 [shape = 'u8[2048]{0}', space=vmem, size = 0x800, scoped, tag = 'output window, operand 1']
    #allocation13 [shape = 's32[2]{0}', space=sflag, size = 0x8, scoped, tag = 'scoped memory for tpu_custom_call.1']
    %16 = vsyncpa [#allocation7], 0
    %s17 = scalar_lea.sflag [#allocation7], 1
    %18 = vsyncpa %s17, 0
    %19 = vsyncpa [#allocation10], 0
    %20 = vsyncpa [#allocation8], 0
    %s21 = scalar_lea.sflag [#allocation8], 1
    %22 = vsyncpa %s21, 0
    %23 = vsyncpa [#allocation13], 0
    %s24 = scalar_lea.sflag [#allocation13], 1
    %25 = vsyncpa %s24, 0
    loop: start=0, step=1, limit=18
    $region2: #{tpu_custom_call.1} parent=1 // loop_pre_header
      _
    $region3: #{tpu_custom_call.1} parent=1 // loop_header
      %s27 = sphi 0, %s31
      %p28 = scmp.ge.s32.totalorder %s27, 18
      %s34 = sphi 0, %s53
      %s35 = sphi 0, %s49
      %s36 = sphi 0, %s45
      %s37 = sphi 0, %s34
      %s38 = sphi 0, %s35
      %s39 = sphi 0, %s36
      %s40 = sphi 0, %s37
      %s41 = sphi 0, %s38
      %s42 = sphi 0, %s39
      %s62 = sphi 0, %s64
      %s65 = sphi 0, %s62
      %s66 = sphi 0, %s65
      %s82 = sphi 0, %s66
      %s86 = sphi 0, %s86
      %s88 = sphi 0, %s86
      %s89 = sphi 0, %s88
      %s103 = sphi 0, %s89
      %s107 = sphi 0, %s107
      %s109 = sphi 0, %s107
      %s110 = sphi 0, %s109
      %s124 = sphi 0, %s110
      %s128 = sphi 0, %s128
      %s130 = sphi 0, %s128
      %s131 = sphi 0, %s130
      %s145 = sphi 0, %s131
      %s149 = sphi 0, %s149
      %s151 = sphi 0, %s149
      %s152 = sphi 0, %s151
      %s166 = sphi 0, %s152
      %s170 = sphi 0, %s170
      %s172 = sphi 0, %s170
      %s173 = sphi 0, %s172
      %s187 = sphi 0, %s173
      %s191 = sphi 0, %s191
      %s193 = sphi 0, %s191
      %s194 = sphi 0, %s193
      %s208 = sphi 0, %s194
      %s212 = sphi 0, %s212
      %s214 = sphi 0, %s212
      %s215 = sphi 0, %s214
      %s229 = sphi 0, %s215
      %s233 = sphi 0, %s233
      %s235 = sphi 0, %s233
      %s236 = sphi 0, %s235
      %s250 = sphi 0, %s236
      %s260 = sphi 0, %s262
      %s263 = sphi 0, %s260
      %s264 = sphi 0, %s263
      %s280 = sphi 0, %s264
      %s286 = sphi 0, %s288
      %s289 = sphi 0, %s286
      %s290 = sphi 0, %s289
      %s306 = sphi 0, %s290
    $region4: #{tpu_custom_call.1} parent=1 // loop_header_branch
      %30 = sbr.rel (%p28) target = $region8
    $region5: #{tpu_custom_call.1} parent=1 // loop_body
      %s32 = ssub.s32 %s27, 1
      %s33 = ssub.s32 %s27, 2
      %s43 = sadd.s32 1, %s36
      %p44 = scmp.ge.s32.totalorder %s43, 4
      %s45 = scalar_select %p44, 0, %s43
      %s46 = sadd.s32 1, %s35
      %s47 = scalar_select %p44, %s46, %s35
      %p48 = scmp.ge.s32.totalorder %s47, 2
      %s49 = scalar_select %p48, 0, %s47
      %s50 = sadd.s32 1, %s34
      %s51 = scalar_select %p48, %s50, %s34
      %p52 = scmp.ge.s32.totalorder %s51, 2
      %s53 = scalar_select %p52, 0, %s51
      %s54 = ssub.s32 1, %s35
      %s55 = smul.u32 %s36, %s54
      %s56 = ssub.s32 1, %s49
      %s57 = smul.u32 %s45, %s56
      %s58 = ssub.s32 %s34, %s53
      %s59 = ssub.s32 %s55, %s57
      %s60 = sor.u32 %s58, %s59
      %p61 = scmp.eq.s32.totalorder %s60, 0
      %s63 = sadd.s32 %s62, 1
      %s64 = scalar_select %p61, %s62, %s63
      %p67 = pneg %p61
      %p68 = scmp.eq.s32.totalorder %s27, 15
      %p69 = por %p67, %p68
      %p70 = scmp.ne.s32.totalorder %s62, %s65
      %p71 = scmp.eq.s32.totalorder %s27, 0
      %p72 = por %p70, %p71
      %p73 = scmp.ne.s32.totalorder %s62, %s65
      %p74 = scmp.eq.s32.totalorder %s32, 15
      %p75 = por %p73, %p74
      %p76 = scmp.ne.s32.totalorder %s65, %s66
      %p77 = scmp.eq.s32.totalorder %s32, 0
      %p78 = por %p76, %p77
      %p79 = scmp.ne.s32.totalorder %s65, %s66
      %p80 = scmp.eq.s32.totalorder %s33, 15
      %p81 = por %p79, %p80
      %p83 = scmp.ne.s32.totalorder %s66, %s82
      %p84 = scmp.eq.s32.totalorder %s33, 0
      %p85 = por %p83, %p84
      %s87 = sadd.s32 %s86, 1
      %p90 = scmp.eq.s32.totalorder %s27, 15
      %p91 = scmp.ne.s32.totalorder %s86, %s88
      %p92 = scmp.eq.s32.totalorder %s27, 0
      %p93 = por %p91, %p92
      %p94 = scmp.ne.s32.totalorder %s86, %s88
      %p95 = scmp.eq.s32.totalorder %s32, 15
      %p96 = por %p94, %p95
      %p97 = scmp.ne.s32.totalorder %s88, %s89
      %p98 = scmp.eq.s32.totalorder %s32, 0
      %p99 = por %p97, %p98
      %p100 = scmp.ne.s32.totalorder %s88, %s89
      %p101 = scmp.eq.s32.totalorder %s33, 15
      %p102 = por %p100, %p101
      %p104 = scmp.ne.s32.totalorder %s89, %s103
      %p105 = scmp.eq.s32.totalorder %s33, 0
      %p106 = por %p104, %p105
      %s108 = sadd.s32 %s107, 1
      %p111 = scmp.eq.s32.totalorder %s27, 15
      %p112 = scmp.ne.s32.totalorder %s107, %s109
      %p113 = scmp.eq.s32.totalorder %s27, 0
      %p114 = por %p112, %p113
      %p115 = scmp.ne.s32.totalorder %s107, %s109
      %p116 = scmp.eq.s32.totalorder %s32, 15
      %p117 = por %p115, %p116
      %p118 = scmp.ne.s32.totalorder %s109, %s110
      %p119 = scmp.eq.s32.totalorder %s32, 0
      %p120 = por %p118, %p119
      %p121 = scmp.ne.s32.totalorder %s109, %s110
      %p122 = scmp.eq.s32.totalorder %s33, 15
      %p123 = por %p121, %p122
      %p125 = scmp.ne.s32.totalorder %s110, %s124
      %p126 = scmp.eq.s32.totalorder %s33, 0
      %p127 = por %p125, %p126
      %s129 = sadd.s32 %s128, 1
      %p132 = scmp.eq.s32.totalorder %s27, 15
      %p133 = scmp.ne.s32.totalorder %s128, %s130
      %p134 = scmp.eq.s32.totalorder %s27, 0
      %p135 = por %p133, %p134
      %p136 = scmp.ne.s32.totalorder %s128, %s130
      %p137 = scmp.eq.s32.totalorder %s32, 15
      %p138 = por %p136, %p137
      %p139 = scmp.ne.s32.totalorder %s130, %s131
      %p140 = scmp.eq.s32.totalorder %s32, 0
      %p141 = por %p139, %p140
      %p142 = scmp.ne.s32.totalorder %s130, %s131
      %p143 = scmp.eq.s32.totalorder %s33, 15
      %p144 = por %p142, %p143
      %p146 = scmp.ne.s32.totalorder %s131, %s145
      %p147 = scmp.eq.s32.totalorder %s33, 0
      %p148 = por %p146, %p147
      %s150 = sadd.s32 %s149, 1
      %p153 = scmp.eq.s32.totalorder %s27, 15
      %p154 = scmp.ne.s32.totalorder %s149, %s151
      %p155 = scmp.eq.s32.totalorder %s27, 0
      %p156 = por %p154, %p155
      %p157 = scmp.ne.s32.totalorder %s149, %s151
      %p158 = scmp.eq.s32.totalorder %s32, 15
      %p159 = por %p157, %p158
      %p160 = scmp.ne.s32.totalorder %s151, %s152
      %p161 = scmp.eq.s32.totalorder %s32, 0
      %p162 = por %p160, %p161
      %p163 = scmp.ne.s32.totalorder %s151, %s152
      %p164 = scmp.eq.s32.totalorder %s33, 15
      %p165 = por %p163, %p164
      %p167 = scmp.ne.s32.totalorder %s152, %s166
      %p168 = scmp.eq.s32.totalorder %s33, 0
      %p169 = por %p167, %p168
      %s171 = sadd.s32 %s170, 1
      %p174 = scmp.eq.s32.totalorder %s27, 15
      %p175 = scmp.ne.s32.totalorder %s170, %s172
      %p176 = scmp.eq.s32.totalorder %s27, 0
      %p177 = por %p175, %p176
      %p178 = scmp.ne.s32.totalorder %s170, %s172
      %p179 = scmp.eq.s32.totalorder %s32, 15
      %p180 = por %p178, %p179
      %p181 = scmp.ne.s32.totalorder %s172, %s173
      %p182 = scmp.eq.s32.totalorder %s32, 0
      %p183 = por %p181, %p182
      %p184 = scmp.ne.s32.totalorder %s172, %s173
      %p185 = scmp.eq.s32.totalorder %s33, 15
      %p186 = por %p184, %p185
      %p188 = scmp.ne.s32.totalorder %s173, %s187
      %p189 = scmp.eq.s32.totalorder %s33, 0
      %p190 = por %p188, %p189
      %s192 = sadd.s32 %s191, 1
      %p195 = scmp.eq.s32.totalorder %s27, 15
      %p196 = scmp.ne.s32.totalorder %s191, %s193
      %p197 = scmp.eq.s32.totalorder %s27, 0
      %p198 = por %p196, %p197
      %p199 = scmp.ne.s32.totalorder %s191, %s193
      %p200 = scmp.eq.s32.totalorder %s32, 15
      %p201 = por %p199, %p200
      %p202 = scmp.ne.s32.totalorder %s193, %s194
      %p203 = scmp.eq.s32.totalorder %s32, 0
      %p204 = por %p202, %p203
      %p205 = scmp.ne.s32.totalorder %s193, %s194
      %p206 = scmp.eq.s32.totalorder %s33, 15
      %p207 = por %p205, %p206
      %p209 = scmp.ne.s32.totalorder %s194, %s208
      %p210 = scmp.eq.s32.totalorder %s33, 0
      %p211 = por %p209, %p210
      %s213 = sadd.s32 %s212, 1
      %p216 = scmp.eq.s32.totalorder %s27, 15
      %p217 = scmp.ne.s32.totalorder %s212, %s214
      %p218 = scmp.eq.s32.totalorder %s27, 0
      %p219 = por %p217, %p218
      %p220 = scmp.ne.s32.totalorder %s212, %s214
      %p221 = scmp.eq.s32.totalorder %s32, 15
      %p222 = por %p220, %p221
      %p223 = scmp.ne.s32.totalorder %s214, %s215
      %p224 = scmp.eq.s32.totalorder %s32, 0
      %p225 = por %p223, %p224
      %p226 = scmp.ne.s32.totalorder %s214, %s215
      %p227 = scmp.eq.s32.totalorder %s33, 15
      %p228 = por %p226, %p227
      %p230 = scmp.ne.s32.totalorder %s215, %s229
      %p231 = scmp.eq.s32.totalorder %s33, 0
      %p232 = por %p230, %p231
      %s234 = sadd.s32 %s233, 1
      %p237 = scmp.eq.s32.totalorder %s27, 15
      %p238 = scmp.ne.s32.totalorder %s233, %s235
      %p239 = scmp.eq.s32.totalorder %s27, 0
      %p240 = por %p238, %p239
      %p241 = scmp.ne.s32.totalorder %s233, %s235
      %p242 = scmp.eq.s32.totalorder %s32, 15
      %p243 = por %p241, %p242
      %p244 = scmp.ne.s32.totalorder %s235, %s236
      %p245 = scmp.eq.s32.totalorder %s32, 0
      %p246 = por %p244, %p245
      %p247 = scmp.ne.s32.totalorder %s235, %s236
      %p248 = scmp.eq.s32.totalorder %s33, 15
      %p249 = por %p247, %p248
      %p251 = scmp.ne.s32.totalorder %s236, %s250
      %p252 = scmp.eq.s32.totalorder %s33, 0
      %p253 = por %p251, %p252
      %s254 = smul.u32 %s36, %s35
      %s255 = smul.u32 %s45, %s49
      %s256 = ssub.s32 %s34, %s53
      %s257 = ssub.s32 %s254, %s255
      %s258 = sor.u32 %s256, %s257
      %p259 = scmp.eq.s32.totalorder %s258, 0
      %s261 = sadd.s32 %s260, 1
      %s262 = scalar_select %p259, %s260, %s261
      %p265 = pneg %p259
      %p266 = scmp.eq.s32.totalorder %s27, 15
      %p267 = por %p265, %p266
      %p268 = scmp.ne.s32.totalorder %s260, %s263
      %p269 = scmp.eq.s32.totalorder %s27, 0
      %p270 = por %p268, %p269
      %p271 = scmp.ne.s32.totalorder %s260, %s263
      %p272 = scmp.eq.s32.totalorder %s32, 15
      %p273 = por %p271, %p272
      %p274 = scmp.ne.s32.totalorder %s263, %s264
      %p275 = scmp.eq.s32.totalorder %s32, 0
      %p276 = por %p274, %p275
      %p277 = scmp.ne.s32.totalorder %s263, %s264
      %p278 = scmp.eq.s32.totalorder %s33, 15
      %p279 = por %p277, %p278
      %p281 = scmp.ne.s32.totalorder %s264, %s280
      %p282 = scmp.eq.s32.totalorder %s33, 0
      %p283 = por %p281, %p282
      %s284 = ssub.s32 %s34, %s53
      %p285 = scmp.eq.s32.totalorder %s284, 0
      %s287 = sadd.s32 %s286, 1
      %s288 = scalar_select %p285, %s286, %s287
      %p291 = pneg %p285
      %p292 = scmp.eq.s32.totalorder %s27, 15
      %p293 = por %p291, %p292
      %p294 = scmp.ne.s32.totalorder %s286, %s289
      %p295 = scmp.eq.s32.totalorder %s27, 0
      %p296 = por %p294, %p295
      %p297 = scmp.ne.s32.totalorder %s286, %s289
      %p298 = scmp.eq.s32.totalorder %s32, 15
      %p299 = por %p297, %p298
      %p300 = scmp.ne.s32.totalorder %s289, %s290
      %p301 = scmp.eq.s32.totalorder %s32, 0
      %p302 = por %p300, %p301
      %p303 = scmp.ne.s32.totalorder %s289, %s290
      %p304 = scmp.eq.s32.totalorder %s33, 15
      %p305 = por %p303, %p304
      %p307 = scmp.ne.s32.totalorder %s290, %s306
      %p308 = scmp.eq.s32.totalorder %s33, 0
      %p309 = por %p307, %p308
      %p310 = scmp.le.s32.totalorder 1, %s27
      %p311 = scmp.lt.s32.totalorder %s27, 17
      %p312 = pnand %p310, %p311
      %p313 = pneg %p312
      // Predicated region
      $region9: #{tpu_custom_call.1} parent=5 // pred_check
        _
      $region10: #{tpu_custom_call.1} parent=5 // pred_check_branch
        %315 = sbr.rel (%p312) target = $region12
      $region11: #{tpu_custom_call.1} parent=5 // pred_region
        %s316 = ssub.s32 %s27, 1
        // Predicated region
        $region13: #{tpu_custom_call.1} parent=11 // pred_check
          %p317 = pneg %p99
        $region14: #{tpu_custom_call.1} parent=11 // pred_check_branch
          %319 = sbr.rel (%p317) target = $region16
        $region15: #{tpu_custom_call.1} parent=11 // pred_region
          _
        $region16: #{tpu_custom_call.1} parent=11 // pred_fallthru
          _
        // Predicated region
        $region17: #{tpu_custom_call.1} parent=11 // pred_check
          %p320 = pneg %p120
        $region18: #{tpu_custom_call.1} parent=11 // pred_check_branch
          %322 = sbr.rel (%p320) target = $region20
        $region19: #{tpu_custom_call.1} parent=11 // pred_region
          _
        $region20: #{tpu_custom_call.1} parent=11 // pred_fallthru
          _
        // Predicated region
        $region21: #{tpu_custom_call.1} parent=11 // pred_check
          %p323 = pneg %p141
        $region22: #{tpu_custom_call.1} parent=11 // pred_check_branch
          %325 = sbr.rel (%p323) target = $region24
        $region23: #{tpu_custom_call.1} parent=11 // pred_region
          _
        $region24: #{tpu_custom_call.1} parent=11 // pred_fallthru
          _
        // Predicated region
        $region25: #{tpu_custom_call.1} parent=11 // pred_check
          %p326 = pneg %p162
        $region26: #{tpu_custom_call.1} parent=11 // pred_check_branch
          %328 = sbr.rel (%p326) target = $region28
        $region27: #{tpu_custom_call.1} parent=11 // pred_region
          _
        $region28: #{tpu_custom_call.1} parent=11 // pred_fallthru
          _
        // Predicated region
        $region29: #{tpu_custom_call.1} parent=11 // pred_check
          %p329 = pneg %p183
        $region30: #{tpu_custom_call.1} parent=11 // pred_check_branch
          %331 = sbr.rel (%p329) target = $region32
        $region31: #{tpu_custom_call.1} parent=11 // pred_region
          _
        $region32: #{tpu_custom_call.1} parent=11 // pred_fallthru
          _
        // Predicated region
        $region33: #{tpu_custom_call.1} parent=11 // pred_check
          %p332 = pneg %p204
        $region34: #{tpu_custom_call.1} parent=11 // pred_check_branch
          %334 = sbr.rel (%p332) target = $region36
        $region35: #{tpu_custom_call.1} parent=11 // pred_region
          _
        $region36: #{tpu_custom_call.1} parent=11 // pred_fallthru
          _
        // Predicated region
        $region37: #{tpu_custom_call.1} parent=11 // pred_check
          %p335 = pneg %p225
        $region38: #{tpu_custom_call.1} parent=11 // pred_check_branch
          %337 = sbr.rel (%p335) target = $region40
        $region39: #{tpu_custom_call.1} parent=11 // pred_region
          %s339 = ssub.s32 2048, 2048
          %340 = vsyncadd [#allocation10], %s339
          %s341 = sshll.u32 [#allocation9], 4
          %s342 = int_to_ptr.vmem [resolvable:$true] %s341
          %347 = dma.hbm_to_vmem [thread:$0]  %s7, 2048, %s342, [#allocation10], 128, 128, 8
        $region40: #{tpu_custom_call.1} parent=11 // pred_fallthru
          _
        // Predicated region
        $region41: #{tpu_custom_call.1} parent=11 // pred_check
          %p348 = pneg %p246
        $region42: #{tpu_custom_call.1} parent=11 // pred_check_branch
          %350 = sbr.rel (%p348) target = $region44
        $region43: #{tpu_custom_call.1} parent=11 // pred_region
          _
        $region44: #{tpu_custom_call.1} parent=11 // pred_fallthru
          _
      $region12: #{tpu_custom_call.1} parent=5 // pred_fallthru
        _
      %p351 = scmp.lt.s32.totalorder %s27, 16
      // Predicated region
      $region45: #{tpu_custom_call.1} parent=5 // pred_check
        %p352 = pneg %p351
      $region46: #{tpu_custom_call.1} parent=5 // pred_check_branch
        %354 = sbr.rel (%p352) target = $region48
      $region47: #{tpu_custom_call.1} parent=5 // pred_region
        // Predicated region
        $region49: #{tpu_custom_call.1} parent=47 // pred_check
          %p355 = pneg %p72
        $region50: #{tpu_custom_call.1} parent=47 // pred_check_branch
          %357 = sbr.rel (%p355) target = $region52
        $region51: #{tpu_custom_call.1} parent=47 // pred_region
          %s358 = sand.u32 %s62, 1
          %s359 = scalar_lea.sflag [#allocation7], %s358
          %s360 = sand.u32 %s62, 1
          %s361 = smul.addr %s360, 64
          %s362 = scalar_lea.vmem [#allocation6], %s361
          %s363 = ssub.s32 1, %s35
          %s364 = smul.u32 %s36, %s363
          %s365 = smul.u32 8, %s364
          %s367 = ssub.s32 1024, 1024
          %368 = vsyncadd %s359, %s367
          %s369 = smul.addr %s34, 32
          %s370 = sadd.s32 %s365, %s369
          %s371 = smul.addr %s370, 128
          %s372 = scalar_lea.hbm %s0, %s371
          %s373 = sshll.u32 %s362, 4
          %s374 = int_to_ptr.vmem [resolvable:$true] %s373
          %379 = dma.hbm_to_vmem [thread:$0]  %s372, 1024, %s374, %s359, 128, 128, 8
        $region52: #{tpu_custom_call.1} parent=47 // pred_fallthru
          _
      $region48: #{tpu_custom_call.1} parent=5 // pred_fallthru
        _
      %p380 = scmp.le.s32.totalorder 1, %s27
      %p381 = scmp.lt.s32.totalorder %s27, 17
      %p382 = pnand %p380, %p381
      %p383 = pneg %p382
      // Predicated region
      $region53: #{tpu_custom_call.1} parent=5 // pred_check
        _
      $region54: #{tpu_custom_call.1} parent=5 // pred_check_branch
        %385 = sbr.rel (%p382) target = $region56
      $region55: #{tpu_custom_call.1} parent=5 // pred_region
        %s386 = ssub.s32 %s27, 1
        %s387 = sand.u32 %s65, 1
        %s388 = scalar_lea.sflag [#allocation7], %s387
        %s389 = sand.u32 %s65, 1
        %s390 = smul.addr %s389, 64
        %s391 = scalar_lea.vmem [#allocation6], %s390
        // Predicated region
        $region57: #{tpu_custom_call.1} parent=55 // pred_check
          %p392 = pneg %p78
        $region58: #{tpu_custom_call.1} parent=55 // pred_check_branch
          %394 = sbr.rel (%p392) target = $region60
        $region59: #{tpu_custom_call.1} parent=55 // pred_region
          %395 = dma.done %s388, 1024
        $region60: #{tpu_custom_call.1} parent=55 // pred_fallthru
          _
        // Predicated region
        $region61: #{tpu_custom_call.1} parent=55 // pred_check
          %p396 = pneg %p225
        $region62: #{tpu_custom_call.1} parent=55 // pred_check_branch
          %398 = sbr.rel (%p396) target = $region64
        $region63: #{tpu_custom_call.1} parent=55 // pred_region
          %399 = dma.done [#allocation10], 2048
        $region64: #{tpu_custom_call.1} parent=55 // pred_fallthru
          _
        %s400 = sand.u32 %s65, 1
        %s401 = scalar_lea.sflag [#allocation7], %s400
        %s402 = sand.u32 %s65, 1
        %s403 = smul.addr %s402, 64
        %s404 = scalar_lea.vmem [#allocation6], %s403
        %p405 = pneg %p78
        %p406 = pneg %p75
        %p407 = pneg %p99
        %p408 = pneg %p96
        %p409 = pneg %p120
        %p410 = pneg %p117
        %p411 = pneg %p141
        %p412 = pneg %p138
        %p413 = pneg %p162
        %p414 = pneg %p159
        %p415 = pneg %p183
        %p416 = pneg %p180
        %p417 = pneg %p204
        %p418 = pneg %p201
        %p419 = pneg %p225
        %p420 = pneg %p222
        %p421 = pneg %p246
        %p422 = pneg %p243
        %p423 = pneg %p276
        %p424 = pneg %p273
        %s425 = sand.u32 %s263, 1
        %s426 = scalar_lea.sflag [#allocation8], %s425
        %s427 = sand.u32 %s263, 1
        %s428 = smul.addr %s427, 64
        %s429 = scalar_lea.vmem [#allocation11], %s428
        %p430 = pneg %p302
        %p431 = pneg %p299
        %s432 = sand.u32 %s289, 1
        %s433 = scalar_lea.sflag [#allocation13], %s432
        %s434 = sand.u32 %s289, 1
        %s435 = smul.addr %s434, 2
        %s436 = scalar_lea.vmem [#allocation12], %s435
        %s437 = ssub.s32 1, %s38
        %s438 = smul.u32 %s39, %s437
        %s439 = smul.u32 8, %s438
        %s440 = smul.u32 %s39, %s38
        %s441 = smul.u32 8, %s440
        %p442 = scmp.eq.s32.totalorder %s38, 0
        %p443 = scmp.eq.s32.totalorder %s39, 0
        %p444 = pnand %p442, %p443
        %p445 = pneg %p444
        // Predicated region
        $region65: #{tpu_custom_call.1} parent=55 // pred_check
          _
        $region66: #{tpu_custom_call.1} parent=55 // pred_check_branch
          %447 = sbr.rel (%p444) target = $region68
        $region67: #{tpu_custom_call.1} parent=55 // pred_region
          %448 = vst [vmem:[#allocation2] sm:$0x1] 0.0
          %449 = vst [vmem:[%s436] sm:$0x3] 0.0
        $region68: #{tpu_custom_call.1} parent=55 // pred_fallthru
          _
        // Predicated region
        $region69: #{tpu_custom_call.1} parent=55 // pred_check
          %p450 = pneg %p442
        $region70: #{tpu_custom_call.1} parent=55 // pred_check_branch
          %452 = sbr.rel (%p450) target = $region72
        $region71: #{tpu_custom_call.1} parent=55 // pred_region
          %v453 = vld [vmem:[%s391] sm:$0xff]
          %v454 = vld [vmem:[%s391 + $0x8] sm:$0xff]
          %v455 = vld [vmem:[%s391 + $0x10] sm:$0xff]
          %v456 = vld [vmem:[%s391 + $0x18] sm:$0xff]
          %v457 = vld [vmem:[%s391 + $0x20] sm:$0xff]
          %v458 = vld [vmem:[%s391 + $0x28] sm:$0xff]
          %v459 = vld [vmem:[%s391 + $0x30] sm:$0xff]
          %v460 = vld [vmem:[%s391 + $0x38] sm:$0xff]
          %v461 = vld [vmem:[%s1] sm:$0xff]
          %v462 = vld [vmem:[%s1 + $0x8] sm:$0xff]
          %v463 = vld [vmem:[%s1 + $0x10] sm:$0xff]
          %v464 = vld [vmem:[%s1 + $0x18] sm:$0xff]
          %v465 = vld [vmem:[%s1 + $0x20] sm:$0xff]
          %v466 = vld [vmem:[%s1 + $0x28] sm:$0xff]
          %v467 = vld [vmem:[%s1 + $0x30] sm:$0xff]
          %v468 = vld [vmem:[%s1 + $0x38] sm:$0xff]
          %v469 = vld [vmem:[%s1 + $0x40] sm:$0xff]
          %v470 = vld [vmem:[%s1 + $0x48] sm:$0xff]
          %v471 = vld [vmem:[%s1 + $0x50] sm:$0xff]
          %v472 = vld [vmem:[%s1 + $0x58] sm:$0xff]
          %v473 = vld [vmem:[%s1 + $0x60] sm:$0xff]
          %v474 = vld [vmem:[%s1 + $0x68] sm:$0xff]
          %v475 = vld [vmem:[%s1 + $0x70] sm:$0xff]
          %v476 = vld [vmem:[%s1 + $0x78] sm:$0xff]
          %v477 = vld [vmem:[%s2] sm:$0x1]
          %v479 = vlaneseq
          %v480 = vshrl.u32 %v479, 7
          %v481 = vsub.s32 0, %v480
          %v482 = vrot.slane %v477, %v481
          %484 = vmatprep.subr.mxu0 0.0
          %485 = vmatpush1.msra.mxu0 %v461
          %486 = vmatprep.subr.mxu0 0.0
          %487 = vmatpush1.msra.mxu0 %v462
          %488 = vmatprep.subr.mxu0 0.0
          %489 = vmatpush1.msra.mxu0 %v463
          %490 = vmatprep.subr.mxu0 0.0
          %491 = vmatpush1.msra.mxu0 %v464
          %492 = vmatprep.subr.mxu0 0.0
          %493 = vmatpush1.msra.mxu0 %v465
          %494 = vmatprep.subr.mxu0 0.0
          %495 = vmatpush1.msra.mxu0 %v466
          %496 = vmatprep.subr.mxu0 0.0
          %497 = vmatpush1.msra.mxu0 %v467
          %498 = vmatprep.subr.mxu0 0.0
          %499 = vmatpush1.msra.mxu0 %v468
          %500 = vmatprep.subr.mxu0 0.0
          %501 = vmatpush1.msra.mxu0 %v469
          %502 = vmatprep.subr.mxu0 0.0
          %503 = vmatpush1.msra.mxu0 %v470
          %504 = vmatprep.subr.mxu0 0.0
          %505 = vmatpush1.msra.mxu0 %v471
          %506 = vmatprep.subr.mxu0 0.0
          %507 = vmatpush1.msra.mxu0 %v472
          %508 = vmatprep.subr.mxu0 0.0
          %509 = vmatpush1.msra.mxu0 %v473
          %510 = vmatprep.subr.mxu0 0.0
          %511 = vmatpush1.msra.mxu0 %v474
          %512 = vmatprep.subr.mxu0 0.0
          %513 = vmatpush1.msra.mxu0 %v475
          %514 = vmatprep.subr.mxu0 0.0
          %515 = vmatpush1.msra.mxu0 %v476
          %516 = vmatprep.subr.mxu0 0.0
          %517 = vmatpush1.msra.mxu0 0.0
          %518 = vmatprep.subr.mxu0 0.0
          %519 = vmatpush1.msra.mxu0 0.0
          %520 = vmatprep.subr.mxu0 0.0
          %521 = vmatpush1.msra.mxu0 0.0
          %522 = vmatprep.subr.mxu0 0.0
          %523 = vmatpush1.msra.mxu0 0.0
          %524 = vmatprep.subr.mxu0 0.0
          %525 = vmatpush1.msra.mxu0 0.0
          %526 = vmatprep.subr.mxu0 0.0
          %527 = vmatpush1.msra.mxu0 0.0
          %528 = vmatprep.subr.mxu0 0.0
          %529 = vmatpush1.msra.mxu0 0.0
          %530 = vmatprep.subr.mxu0 0.0
          %531 = vmatpush1.msra.mxu0 0.0
          %532 = vmatprep.subr.mxu0 0.0
          %533 = vmatpush1.msra.mxu0 0.0
          %534 = vmatprep.subr.mxu0 0.0
          %535 = vmatpush1.msra.mxu0 0.0
          %536 = vmatprep.subr.mxu0 0.0
          %537 = vmatpush1.msra.mxu0 0.0
          %538 = vmatprep.subr.mxu0 0.0
          %539 = vmatpush1.msra.mxu0 0.0
          %540 = vmatprep.subr.mxu0 0.0
          %541 = vmatpush1.msra.mxu0 0.0
          %542 = vmatprep.subr.mxu0 0.0
          %543 = vmatpush1.msra.mxu0 0.0
          %544 = vmatprep.subr.mxu0 0.0
          %545 = vmatpush1.msra.mxu0 0.0
          %546 = vmatprep.subr.mxu0 0.0
          %547 = vmatpush1.msra.mxu0 0.0
          %548 = vmatprep.mubr.f32.mxu0 0.0
          %549 = vmatmul.mubr.f32.gmra.mrb[0].mxu0 %v453
          %v550 = vpop.f32.mrb[0].mxu0
          %v551 = vadd.f32 %v482, %v550
          %v552 = vpop.f32.mrb[0].mxu0
          %553 = vmatprep.mubr.f32.mxu0 0.0
          %554 = vmatmul.mubr.f32.gmra.mrb[0].mxu0 %v454
          %v555 = vpop.f32.mrb[0].mxu0
          %v556 = vadd.f32 %v482, %v555
          %v557 = vpop.f32.mrb[0].mxu0
          %558 = vmatprep.mubr.f32.mxu0 0.0
          %559 = vmatmul.mubr.f32.gmra.mrb[0].mxu0 %v455
          %v560 = vpop.f32.mrb[0].mxu0
          %v561 = vadd.f32 %v482, %v560
          %v562 = vpop.f32.mrb[0].mxu0
          %563 = vmatprep.mubr.f32.mxu0 0.0
          %564 = vmatmul.mubr.f32.gmra.mrb[0].mxu0 %v456
          %v565 = vpop.f32.mrb[0].mxu0
          %v566 = vadd.f32 %v482, %v565
          %v567 = vpop.f32.mrb[0].mxu0
          %568 = vmatprep.mubr.f32.mxu0 0.0
          %569 = vmatmul.mubr.f32.gmra.mrb[0].mxu0 %v457
          %v570 = vpop.f32.mrb[0].mxu0
          %v571 = vadd.f32 %v482, %v570
          %v572 = vpop.f32.mrb[0].mxu0
          %573 = vmatprep.mubr.f32.mxu0 0.0
          %574 = vmatmul.mubr.f32.gmra.mrb[0].mxu0 %v458
          %v575 = vpop.f32.mrb[0].mxu0
          %v576 = vadd.f32 %v482, %v575
          %v577 = vpop.f32.mrb[0].mxu0
          %578 = vmatprep.mubr.f32.mxu0 0.0
          %579 = vmatmul.mubr.f32.gmra.mrb[0].mxu0 %v459
          %v580 = vpop.f32.mrb[0].mxu0
          %v581 = vadd.f32 %v482, %v580
          %v582 = vpop.f32.mrb[0].mxu0
          %583 = vmatprep.mubr.f32.mxu0 0.0
          %584 = vmatmul.mubr.f32.gmra.mrb[0].mxu0 %v460
          %v585 = vpop.f32.mrb[0].mxu0
          %v586 = vadd.f32 %v482, %v585
          %v587 = vpop.f32.mrb[0].mxu0
          %588 = vdwg.mxu0
          %v589 = vmul.f32 %v551, 0.5
          %v590 = vmul.f32 %v556, 0.5
          %v591 = vmul.f32 %v561, 0.5
          %v592 = vmul.f32 %v566, 0.5
          %v593 = vmul.f32 %v571, 0.5
          %v594 = vmul.f32 %v576, 0.5
          %v595 = vmul.f32 %v581, 0.5
          %v596 = vmul.f32 %v586, 0.5
          %v597 = vmul.f32 %v551, 0.70710677
          %v598 = vmul.f32 %v556, 0.70710677
          %v599 = vmul.f32 %v561, 0.70710677
          %v600 = vmul.f32 %v566, 0.70710677
          %v601 = vmul.f32 %v571, 0.70710677
          %v602 = vmul.f32 %v576, 0.70710677
          %v603 = vmul.f32 %v581, 0.70710677
          %v604 = vmul.f32 %v586, 0.70710677
          %v605 = verf.f32.pop %v597
          %v606 = verf.f32.pop %v598
          %v607 = verf.f32.pop %v599
          %v608 = verf.f32.pop %v600
          %v609 = verf.f32.pop %v601
          %v610 = verf.f32.pop %v602
          %v611 = verf.f32.pop %v603
          %v612 = verf.f32.pop %v604
          %v613 = vadd.f32 %v605, 1.0
          %v614 = vadd.f32 %v606, 1.0
          %v615 = vadd.f32 %v607, 1.0
          %v616 = vadd.f32 %v608, 1.0
          %v617 = vadd.f32 %v609, 1.0
          %v618 = vadd.f32 %v610, 1.0
          %v619 = vadd.f32 %v611, 1.0
          %v620 = vadd.f32 %v612, 1.0
          %v621 = vmul.f32 %v589, %v613
          %v622 = vmul.f32 %v590, %v614
          %v623 = vmul.f32 %v591, %v615
          %v624 = vmul.f32 %v592, %v616
          %v625 = vmul.f32 %v593, %v617
          %v626 = vmul.f32 %v594, %v618
          %v627 = vmul.f32 %v595, %v619
          %v628 = vmul.f32 %v596, %v620
          %v629 = vld [vmem:[#allocation2] sm:$0x1]
          %v630 = vadd.f32 %v621, %v622
          %v631 = vadd.f32 %v630, %v623
          %v632 = vadd.f32 %v631, %v624
          %v633 = vadd.f32 %v632, %v625
          %v634 = vadd.f32 %v633, %v626
          %v635 = vadd.f32 %v634, %v627
          %v636 = vadd.f32 %v635, %v628
          %v637 = vrot.slane %v636, 4
          %v638 = vadd.f32 %v636, %v637
          %v639 = vrot.slane %v638, 2
          %v640 = vadd.f32 %v638, %v639
          %v641 = vrot.slane %v640, 1
          %v642 = vadd.f32 %v640, %v641
          %v643 = vadd.f32 %v629, %v642
          %644 = vst [vmem:[#allocation2] sm:$0x1] %v643
          %s645 = smul.u32 %s39, 64
          %s646 = scalar_lea.vmem [#allocation4], %s645
          %647 = vst [vmem:[%s646] sm:$0xff] %v621
          %648 = vst [vmem:[%s646 + $0x8] sm:$0xff] %v622
          %649 = vst [vmem:[%s646 + $0x10] sm:$0xff] %v623
          %650 = vst [vmem:[%s646 + $0x18] sm:$0xff] %v624
          %651 = vst [vmem:[%s646 + $0x20] sm:$0xff] %v625
          %652 = vst [vmem:[%s646 + $0x28] sm:$0xff] %v626
          %653 = vst [vmem:[%s646 + $0x30] sm:$0xff] %v627
          %654 = vst [vmem:[%s646 + $0x38] sm:$0xff] %v628
          %s655 = scalar_lea.vmem [#allocation5], %s645
          %656 = vst [vmem:[%s655] sm:$0xff] %v453
          %657 = vst [vmem:[%s655 + $0x8] sm:$0xff] %v454
          %658 = vst [vmem:[%s655 + $0x10] sm:$0xff] %v455
          %659 = vst [vmem:[%s655 + $0x18] sm:$0xff] %v456
          %660 = vst [vmem:[%s655 + $0x20] sm:$0xff] %v457
          %661 = vst [vmem:[%s655 + $0x28] sm:$0xff] %v458
          %662 = vst [vmem:[%s655 + $0x30] sm:$0xff] %v459
          %663 = vst [vmem:[%s655 + $0x38] sm:$0xff] %v460
        $region72: #{tpu_custom_call.1} parent=55 // pred_fallthru
          _
        %p664 = scmp.eq.s32.totalorder %s39, 3
        %p665 = pnand %p442, %p664
        %p666 = pneg %p665
        // Predicated region
        $region73: #{tpu_custom_call.1} parent=55 // pred_check
          _
        $region74: #{tpu_custom_call.1} parent=55 // pred_check_branch
          %668 = sbr.rel (%p665) target = $region76
        $region75: #{tpu_custom_call.1} parent=55 // pred_region
          %v669 = vld [vmem:[#allocation2] sm:$0x1]
          %v670 = vmul.f32 %v669, 0.00390625
          %v671 = vld [vmem:[%s3] sm:$0xff]
          %v672 = vld [vmem:[%s3 + $0x8] sm:$0xff]
          %v673 = vld [vmem:[%s3 + $0x10] sm:$0xff]
          %v674 = vld [vmem:[%s3 + $0x18] sm:$0xff]
          %v675 = vld [vmem:[%s3 + $0x20] sm:$0xff]
          %v676 = vld [vmem:[%s3 + $0x28] sm:$0xff]
          %v677 = vld [vmem:[%s3 + $0x30] sm:$0xff]
          %v678 = vld [vmem:[%s3 + $0x38] sm:$0xff]
          %v679 = vld [vmem:[%s3 + $0x40] sm:$0xff]
          %v680 = vld [vmem:[%s3 + $0x48] sm:$0xff]
          %v681 = vld [vmem:[%s3 + $0x50] sm:$0xff]
          %v682 = vld [vmem:[%s3 + $0x58] sm:$0xff]
          %v683 = vld [vmem:[%s3 + $0x60] sm:$0xff]
          %v684 = vld [vmem:[%s3 + $0x68] sm:$0xff]
          %v685 = vld [vmem:[%s3 + $0x70] sm:$0xff]
          %v686 = vld [vmem:[%s3 + $0x78] sm:$0xff]
          %v687 = vld [vmem:[%s4] sm:$0x1]
          %688 = vmatprep.subr.mxu0 0.0
          %689 = vmatpush1.msra.mxu0 %v671
          %690 = vmatprep.subr.mxu0 0.0
          %691 = vmatpush1.msra.mxu0 %v672
          %692 = vmatprep.subr.mxu0 0.0
          %693 = vmatpush1.msra.mxu0 %v673
          %694 = vmatprep.subr.mxu0 0.0
          %695 = vmatpush1.msra.mxu0 %v674
          %696 = vmatprep.subr.mxu0 0.0
          %697 = vmatpush1.msra.mxu0 %v675
          %698 = vmatprep.subr.mxu0 0.0
          %699 = vmatpush1.msra.mxu0 %v676
          %700 = vmatprep.subr.mxu0 0.0
          %701 = vmatpush1.msra.mxu0 %v677
          %702 = vmatprep.subr.mxu0 0.0
          %703 = vmatpush1.msra.mxu0 %v678
          %704 = vmatprep.subr.mxu0 0.0
          %705 = vmatpush1.msra.mxu0 %v679
          %706 = vmatprep.subr.mxu0 0.0
          %707 = vmatpush1.msra.mxu0 %v680
          %708 = vmatprep.subr.mxu0 0.0
          %709 = vmatpush1.msra.mxu0 %v681
          %710 = vmatprep.subr.mxu0 0.0
          %711 = vmatpush1.msra.mxu0 %v682
          %712 = vmatprep.subr.mxu0 0.0
          %713 = vmatpush1.msra.mxu0 %v683
          %714 = vmatprep.subr.mxu0 0.0
          %715 = vmatpush1.msra.mxu0 %v684
          %716 = vmatprep.subr.mxu0 0.0
          %717 = vmatpush1.msra.mxu0 %v685
          %718 = vmatprep.subr.mxu0 0.0
          %719 = vmatpush1.msra.mxu0 %v686
          %720 = vmatprep.subr.mxu0 0.0
          %721 = vmatpush1.msra.mxu0 0.0
          %722 = vmatprep.subr.mxu0 0.0
          %723 = vmatpush1.msra.mxu0 0.0
          %724 = vmatprep.subr.mxu0 0.0
          %725 = vmatpush1.msra.mxu0 0.0
          %726 = vmatprep.subr.mxu0 0.0
          %727 = vmatpush1.msra.mxu0 0.0
          %728 = vmatprep.subr.mxu0 0.0
          %729 = vmatpush1.msra.mxu0 0.0
          %730 = vmatprep.subr.mxu0 0.0
          %731 = vmatpush1.msra.mxu0 0.0
          %732 = vmatprep.subr.mxu0 0.0
          %733 = vmatpush1.msra.mxu0 0.0
          %734 = vmatprep.subr.mxu0 0.0
          %735 = vmatpush1.msra.mxu0 0.0
          %736 = vmatprep.subr.mxu0 0.0
          %737 = vmatpush1.msra.mxu0 0.0
          %738 = vmatprep.subr.mxu0 0.0
          %739 = vmatpush1.msra.mxu0 0.0
          %740 = vmatprep.subr.mxu0 0.0
          %741 = vmatpush1.msra.mxu0 0.0
          %742 = vmatprep.subr.mxu0 0.0
          %743 = vmatpush1.msra.mxu0 0.0
          %744 = vmatprep.subr.mxu0 0.0
          %745 = vmatpush1.msra.mxu0 0.0
          %746 = vmatprep.subr.mxu0 0.0
          %747 = vmatpush1.msra.mxu0 0.0
          %748 = vmatprep.subr.mxu0 0.0
          %749 = vmatpush1.msra.mxu0 0.0
          %750 = vmatprep.subr.mxu0 0.0
          %751 = vmatpush1.msra.mxu0 0.0
          %752 = vmatprep.mubr.f32.mxu0 0.0
          %753 = vmatmul.mubr.f32.gmra.mrb[0].mxu0 %v670
          %v754 = vpop.f32.mrb[0].mxu0
          %v755 = vadd.f32 %v687, %v754
          %v756 = vpop.f32.mrb[0].mxu0
          %757 = vdwg.mxu0
          %v758 = vmax.f32 %v755, 0.0
          %v759 = vld [vmem:[%s5] sm:$0xf]
          %v760 = vld [vmem:[%s6] sm:$0x1]
          %vm761 = vcmask 31744
          %v763 = vsel %vm761, %v758, 0
          %vm765 = vcmask 1043456
          %v767 = vsel %vm765, %v759, 0
          %769 = vmatprep.subr.mxu0 0.0
          %770 = vmatpush1.msra.mxu0 %v767
          %771 = vmatprep.subr.mxu0 0.0
          %772 = vmatpush1.msra.mxu0 0.0
          %773 = vmatprep.subr.mxu0 0.0
          %774 = vmatpush1.msra.mxu0 0.0
          %775 = vmatprep.subr.mxu0 0.0
          %776 = vmatpush1.msra.mxu0 0.0
          %777 = vmatprep.subr.mxu0 0.0
          %778 = vmatpush1.msra.mxu0 0.0
          %779 = vmatprep.subr.mxu0 0.0
          %780 = vmatpush1.msra.mxu0 0.0
          %781 = vmatprep.subr.mxu0 0.0
          %782 = vmatpush1.msra.mxu0 0.0
          %783 = vmatprep.subr.mxu0 0.0
          %784 = vmatpush1.msra.mxu0 0.0
          %785 = vmatprep.subr.mxu0 0.0
          %786 = vmatpush1.msra.mxu0 0.0
          %787 = vmatprep.subr.mxu0 0.0
          %788 = vmatpush1.msra.mxu0 0.0
          %789 = vmatprep.subr.mxu0 0.0
          %790 = vmatpush1.msra.mxu0 0.0
          %791 = vmatprep.subr.mxu0 0.0
          %792 = vmatpush1.msra.mxu0 0.0
          %793 = vmatprep.subr.mxu0 0.0
          %794 = vmatpush1.msra.mxu0 0.0
          %795 = vmatprep.subr.mxu0 0.0
          %796 = vmatpush1.msra.mxu0 0.0
          %797 = vmatprep.subr.mxu0 0.0
          %798 = vmatpush1.msra.mxu0 0.0
          %799 = vmatprep.subr.mxu0 0.0
          %800 = vmatpush1.msra.mxu0 0.0
          %801 = vmatprep.subr.mxu0 0.0
          %802 = vmatpush1.msra.mxu0 0.0
          %803 = vmatprep.subr.mxu0 0.0
          %804 = vmatpush1.msra.mxu0 0.0
          %805 = vmatprep.subr.mxu0 0.0
          %806 = vmatpush1.msra.mxu0 0.0
          %807 = vmatprep.subr.mxu0 0.0
          %808 = vmatpush1.msra.mxu0 0.0
          %809 = vmatprep.subr.mxu0 0.0
          %810 = vmatpush1.msra.mxu0 0.0
          %811 = vmatprep.subr.mxu0 0.0
          %812 = vmatpush1.msra.mxu0 0.0
          %813 = vmatprep.subr.mxu0 0.0
          %814 = vmatpush1.msra.mxu0 0.0
          %815 = vmatprep.subr.mxu0 0.0
          %816 = vmatpush1.msra.mxu0 0.0
          %817 = vmatprep.subr.mxu0 0.0
          %818 = vmatpush1.msra.mxu0 0.0
          %819 = vmatprep.subr.mxu0 0.0
          %820 = vmatpush1.msra.mxu0 0.0
          %821 = vmatprep.subr.mxu0 0.0
          %822 = vmatpush1.msra.mxu0 0.0
          %823 = vmatprep.subr.mxu0 0.0
          %824 = vmatpush1.msra.mxu0 0.0
          %825 = vmatprep.subr.mxu0 0.0
          %826 = vmatpush1.msra.mxu0 0.0
          %827 = vmatprep.subr.mxu0 0.0
          %828 = vmatpush1.msra.mxu0 0.0
          %829 = vmatprep.subr.mxu0 0.0
          %830 = vmatpush1.msra.mxu0 0.0
          %831 = vmatprep.subr.mxu0 0.0
          %832 = vmatpush1.msra.mxu0 0.0
          %833 = vmatprep.mubr.f32.mxu0 0.0
          %834 = vmatmul.mubr.f32.gmra.mrb[0].mxu0 %v763
          %v835 = vpop.f32.mrb[0].mxu0
          %v836 = vadd.f32 %v760, %v835
          %v837 = vpop.f32.mrb[0].mxu0
          %838 = vdwg.mxu0
          %v839 = vxor.u32 %v836, 2147483648
          %v840 = vmul.f32 %v839, 1.442695
          %v841 = vpow.pop %v840
          %v842 = vadd.f32 %v841, 1.0
          %v843 = vrcp.pop %v842
          %v844 = vmul.f32 1.0, %v843
          %845 = vst [vmem:[#allocation3] sm:$0x1] %v844
        $region76: #{tpu_custom_call.1} parent=55 // pred_fallthru
          _
        %p846 = scmp.eq.s32.totalorder %s38, 1
        // Predicated region
        $region77: #{tpu_custom_call.1} parent=55 // pred_check
          %p847 = pneg %p846
        $region78: #{tpu_custom_call.1} parent=55 // pred_check_branch
          %849 = sbr.rel (%p847) target = $region80
        $region79: #{tpu_custom_call.1} parent=55 // pred_region
          %s850 = smul.u32 %s39, 64
          %s851 = scalar_lea.vmem [#allocation4], %s850
          %v852 = vld [vmem:[%s851] sm:$0xff]
          %v853 = vld [vmem:[%s851 + $0x8] sm:$0xff]
          %v854 = vld [vmem:[%s851 + $0x10] sm:$0xff]
          %v855 = vld [vmem:[%s851 + $0x18] sm:$0xff]
          %v856 = vld [vmem:[%s851 + $0x20] sm:$0xff]
          %v857 = vld [vmem:[%s851 + $0x28] sm:$0xff]
          %v858 = vld [vmem:[%s851 + $0x30] sm:$0xff]
          %v859 = vld [vmem:[%s851 + $0x38] sm:$0xff]
          %s860 = scalar_lea.vmem [#allocation5], %s850
          %v861 = vld [vmem:[%s860] sm:$0xff]
          %v862 = vld [vmem:[%s860 + $0x8] sm:$0xff]
          %v863 = vld [vmem:[%s860 + $0x10] sm:$0xff]
          %v864 = vld [vmem:[%s860 + $0x18] sm:$0xff]
          %v865 = vld [vmem:[%s860 + $0x20] sm:$0xff]
          %v866 = vld [vmem:[%s860 + $0x28] sm:$0xff]
          %v867 = vld [vmem:[%s860 + $0x30] sm:$0xff]
          %v868 = vld [vmem:[%s860 + $0x38] sm:$0xff]
          %v869 = vld [vmem:[#allocation3] sm:$0x1]
          %v871 = vlaneseq
          %v872 = vshrl.u32 %v871, 7
          %v873 = vsub.s32 0, %v872
          %v874 = vrot.slane %v869, %v873
          %v876 = vmul.f32 %v852, %v874
          %v877 = vmul.f32 %v853, %v874
          %v878 = vmul.f32 %v854, %v874
          %v879 = vmul.f32 %v855, %v874
          %v880 = vmul.f32 %v856, %v874
          %v881 = vmul.f32 %v857, %v874
          %v882 = vmul.f32 %v858, %v874
          %v883 = vmul.f32 %v859, %v874
          %v884 = vld [vmem:[#allocation9] sm:$0xff]
          %v885 = vld [vmem:[#allocation9 + $0x8] sm:$0xff]
          %v886 = vld [vmem:[#allocation9 + $0x10] sm:$0xff]
          %v887 = vld [vmem:[#allocation9 + $0x18] sm:$0xff]
          %v888 = vld [vmem:[#allocation9 + $0x20] sm:$0xff]
          %v889 = vld [vmem:[#allocation9 + $0x28] sm:$0xff]
          %v890 = vld [vmem:[#allocation9 + $0x30] sm:$0xff]
          %v891 = vld [vmem:[#allocation9 + $0x38] sm:$0xff]
          %v892 = vld [vmem:[#allocation9 + $0x40] sm:$0xff]
          %v893 = vld [vmem:[#allocation9 + $0x48] sm:$0xff]
          %v894 = vld [vmem:[#allocation9 + $0x50] sm:$0xff]
          %v895 = vld [vmem:[#allocation9 + $0x58] sm:$0xff]
          %v896 = vld [vmem:[#allocation9 + $0x60] sm:$0xff]
          %v897 = vld [vmem:[#allocation9 + $0x68] sm:$0xff]
          %v898 = vld [vmem:[#allocation9 + $0x70] sm:$0xff]
          %v899 = vld [vmem:[#allocation9 + $0x78] sm:$0xff]
          %v900 = vld [vmem:[%s8] sm:$0x1]
          %v902 = vlaneseq
          %v903 = vshrl.u32 %v902, 7
          %v904 = vsub.s32 0, %v903
          %v905 = vrot.slane %v900, %v904
          %907 = vmatprep.subr.mxu0 0.0
          %908 = vmatpush1.msra.mxu0 %v884
          %909 = vmatprep.subr.mxu0 0.0
          %910 = vmatpush1.msra.mxu0 %v885
          %911 = vmatprep.subr.mxu0 0.0
          %912 = vmatpush1.msra.mxu0 %v886
          %913 = vmatprep.subr.mxu0 0.0
          %914 = vmatpush1.msra.mxu0 %v887
          %915 = vmatprep.subr.mxu0 0.0
          %916 = vmatpush1.msra.mxu0 %v888
          %917 = vmatprep.subr.mxu0 0.0
          %918 = vmatpush1.msra.mxu0 %v889
          %919 = vmatprep.subr.mxu0 0.0
          %920 = vmatpush1.msra.mxu0 %v890
          %921 = vmatprep.subr.mxu0 0.0
          %922 = vmatpush1.msra.mxu0 %v891
          %923 = vmatprep.subr.mxu0 0.0
          %924 = vmatpush1.msra.mxu0 %v892
          %925 = vmatprep.subr.mxu0 0.0
          %926 = vmatpush1.msra.mxu0 %v893
          %927 = vmatprep.subr.mxu0 0.0
          %928 = vmatpush1.msra.mxu0 %v894
          %929 = vmatprep.subr.mxu0 0.0
          %930 = vmatpush1.msra.mxu0 %v895
          %931 = vmatprep.subr.mxu0 0.0
          %932 = vmatpush1.msra.mxu0 %v896
          %933 = vmatprep.subr.mxu0 0.0
          %934 = vmatpush1.msra.mxu0 %v897
          %935 = vmatprep.subr.mxu0 0.0
          %936 = vmatpush1.msra.mxu0 %v898
          %937 = vmatprep.subr.mxu0 0.0
          %938 = vmatpush1.msra.mxu0 %v899
          %939 = vmatprep.subr.mxu0 0.0
          %940 = vmatpush1.msra.mxu0 0.0
          %941 = vmatprep.subr.mxu0 0.0
          %942 = vmatpush1.msra.mxu0 0.0
          %943 = vmatprep.subr.mxu0 0.0
          %944 = vmatpush1.msra.mxu0 0.0
          %945 = vmatprep.subr.mxu0 0.0
          %946 = vmatpush1.msra.mxu0 0.0
          %947 = vmatprep.subr.mxu0 0.0
          %948 = vmatpush1.msra.mxu0 0.0
          %949 = vmatprep.subr.mxu0 0.0
          %950 = vmatpush1.msra.mxu0 0.0
          %951 = vmatprep.subr.mxu0 0.0
          %952 = vmatpush1.msra.mxu0 0.0
          %953 = vmatprep.subr.mxu0 0.0
          %954 = vmatpush1.msra.mxu0 0.0
          %955 = vmatprep.subr.mxu0 0.0
          %956 = vmatpush1.msra.mxu0 0.0
          %957 = vmatprep.subr.mxu0 0.0
          %958 = vmatpush1.msra.mxu0 0.0
          %959 = vmatprep.subr.mxu0 0.0
          %960 = vmatpush1.msra.mxu0 0.0
          %961 = vmatprep.subr.mxu0 0.0
          %962 = vmatpush1.msra.mxu0 0.0
          %963 = vmatprep.subr.mxu0 0.0
          %964 = vmatpush1.msra.mxu0 0.0
          %965 = vmatprep.subr.mxu0 0.0
          %966 = vmatpush1.msra.mxu0 0.0
          %967 = vmatprep.subr.mxu0 0.0
          %968 = vmatpush1.msra.mxu0 0.0
          %969 = vmatprep.subr.mxu0 0.0
          %970 = vmatpush1.msra.mxu0 0.0
          %971 = vmatprep.mubr.f32.mxu0 0.0
          %972 = vmatmul.mubr.f32.gmra.mrb[0].mxu0 %v876
          %v973 = vpop.f32.mrb[0].mxu0
          %v974 = vadd.f32 %v905, %v973
          %v975 = vpop.f32.mrb[0].mxu0
          %976 = vmatprep.mubr.f32.mxu0 0.0
          %977 = vmatmul.mubr.f32.gmra.mrb[0].mxu0 %v877
          %v978 = vpop.f32.mrb[0].mxu0
          %v979 = vadd.f32 %v905, %v978
          %v980 = vpop.f32.mrb[0].mxu0
          %981 = vmatprep.mubr.f32.mxu0 0.0
          %982 = vmatmul.mubr.f32.gmra.mrb[0].mxu0 %v878
          %v983 = vpop.f32.mrb[0].mxu0
          %v984 = vadd.f32 %v905, %v983
          %v985 = vpop.f32.mrb[0].mxu0
          %986 = vmatprep.mubr.f32.mxu0 0.0
          %987 = vmatmul.mubr.f32.gmra.mrb[0].mxu0 %v879
          %v988 = vpop.f32.mrb[0].mxu0
          %v989 = vadd.f32 %v905, %v988
          %v990 = vpop.f32.mrb[0].mxu0
          %991 = vmatprep.mubr.f32.mxu0 0.0
          %992 = vmatmul.mubr.f32.gmra.mrb[0].mxu0 %v880
          %v993 = vpop.f32.mrb[0].mxu0
          %v994 = vadd.f32 %v905, %v993
          %v995 = vpop.f32.mrb[0].mxu0
          %996 = vmatprep.mubr.f32.mxu0 0.0
          %997 = vmatmul.mubr.f32.gmra.mrb[0].mxu0 %v881
          %v998 = vpop.f32.mrb[0].mxu0
          %v999 = vadd.f32 %v905, %v998
          %v1000 = vpop.f32.mrb[0].mxu0
          %1001 = vmatprep.mubr.f32.mxu0 0.0
          %1002 = vmatmul.mubr.f32.gmra.mrb[0].mxu0 %v882
          %v1003 = vpop.f32.mrb[0].mxu0
          %v1004 = vadd.f32 %v905, %v1003
          %v1005 = vpop.f32.mrb[0].mxu0
          %1006 = vmatprep.mubr.f32.mxu0 0.0
          %1007 = vmatmul.mubr.f32.gmra.mrb[0].mxu0 %v883
          %v1008 = vpop.f32.mrb[0].mxu0
          %v1009 = vadd.f32 %v905, %v1008
          %v1010 = vpop.f32.mrb[0].mxu0
          %1011 = vdwg.mxu0
          %v1012 = vadd.f32 %v974, %v861
          %v1013 = vadd.f32 %v979, %v862
          %v1014 = vadd.f32 %v984, %v863
          %v1015 = vadd.f32 %v989, %v864
          %v1016 = vadd.f32 %v994, %v865
          %v1017 = vadd.f32 %v999, %v866
          %v1018 = vadd.f32 %v1004, %v867
          %v1019 = vadd.f32 %v1009, %v868
          %1020 = vst [vmem:[%s429] sm:$0xff] %v1012
          %1021 = vst [vmem:[%s429 + $0x8] sm:$0xff] %v1013
          %1022 = vst [vmem:[%s429 + $0x10] sm:$0xff] %v1014
          %1023 = vst [vmem:[%s429 + $0x18] sm:$0xff] %v1015
          %1024 = vst [vmem:[%s429 + $0x20] sm:$0xff] %v1016
          %1025 = vst [vmem:[%s429 + $0x28] sm:$0xff] %v1017
          %1026 = vst [vmem:[%s429 + $0x30] sm:$0xff] %v1018
          %1027 = vst [vmem:[%s429 + $0x38] sm:$0xff] %v1019
          %v1028 = vld [vmem:[%s436] sm:$0x1]
          %v1029 = vadd.f32 %v1012, %v1013
          %v1030 = vadd.f32 %v1029, %v1014
          %v1031 = vadd.f32 %v1030, %v1015
          %v1032 = vadd.f32 %v1031, %v1016
          %v1033 = vadd.f32 %v1032, %v1017
          %v1034 = vadd.f32 %v1033, %v1018
          %v1035 = vadd.f32 %v1034, %v1019
          %v1036 = vrot.slane %v1035, 4
          %v1037 = vadd.f32 %v1035, %v1036
          %v1038 = vrot.slane %v1037, 2
          %v1039 = vadd.f32 %v1037, %v1038
          %v1040 = vrot.slane %v1039, 1
          %v1041 = vadd.f32 %v1039, %v1040
          %v1042 = vadd.f32 %v1028, %v1041
          %1043 = vst [vmem:[%s436] sm:$0x1] %v1042
          %v1044 = vld [vmem:[%s436 + $0x1] sm:$0x1]
          %v1045 = vmul.f32 %v1012, %v1012
          %v1046 = vmul.f32 %v1013, %v1013
          %v1047 = vmul.f32 %v1014, %v1014
          %v1048 = vmul.f32 %v1015, %v1015
          %v1049 = vmul.f32 %v1016, %v1016
          %v1050 = vmul.f32 %v1017, %v1017
          %v1051 = vmul.f32 %v1018, %v1018
          %v1052 = vmul.f32 %v1019, %v1019
          %v1053 = vadd.f32 %v1045, %v1046
          %v1054 = vadd.f32 %v1053, %v1047
          %v1055 = vadd.f32 %v1054, %v1048
          %v1056 = vadd.f32 %v1055, %v1049
          %v1057 = vadd.f32 %v1056, %v1050
          %v1058 = vadd.f32 %v1057, %v1051
          %v1059 = vadd.f32 %v1058, %v1052
          %v1060 = vrot.slane %v1059, 4
          %v1061 = vadd.f32 %v1059, %v1060
          %v1062 = vrot.slane %v1061, 2
          %v1063 = vadd.f32 %v1061, %v1062
          %v1064 = vrot.slane %v1063, 1
          %v1065 = vadd.f32 %v1063, %v1064
          %v1066 = vadd.f32 %v1044, %v1065
          %1067 = vst [vmem:[%s436 + $0x1] sm:$0x1] %v1066
        $region80: #{tpu_custom_call.1} parent=55 // pred_fallthru
          _
        %s1068 = sand.u32 %s263, 1
        %s1069 = scalar_lea.sflag [#allocation8], %s1068
        %s1070 = sand.u32 %s263, 1
        %s1071 = smul.addr %s1070, 64
        %s1072 = scalar_lea.vmem [#allocation11], %s1071
        %s1073 = sand.u32 %s289, 1
        %s1074 = scalar_lea.sflag [#allocation13], %s1073
        %s1075 = sand.u32 %s289, 1
        %s1076 = smul.addr %s1075, 2
        %s1077 = scalar_lea.vmem [#allocation12], %s1076
        // Predicated region
        $region81: #{tpu_custom_call.1} parent=55 // pred_check
          %p1078 = pneg %p273
        $region82: #{tpu_custom_call.1} parent=55 // pred_check_branch
          %1080 = sbr.rel (%p1078) target = $region84
        $region83: #{tpu_custom_call.1} parent=55 // pred_region
          %s1081 = smul.u32 %s39, %s38
          %s1082 = smul.u32 8, %s1081
          %s1084 = ssub.s32 1024, 1024
          %1085 = vsyncadd %s1069, %s1084
          %s1086 = smul.addr %s37, 32
          %s1087 = sadd.s32 %s1082, %s1086
          %s1088 = smul.addr %s1087, 128
          %s1089 = scalar_lea.hbm %s9, %s1088
          %s1090 = sshll.u32 %s1072, 4
          %s1091 = int_to_ptr.vmem [resolvable:$true] %s1090
          %1096 = dma.vmem_to_hbm [thread:$0]  %s1091, 1024, %s1089, %s1069, 128, 128, 8
        $region84: #{tpu_custom_call.1} parent=55 // pred_fallthru
          _
        // Predicated region
        $region85: #{tpu_custom_call.1} parent=55 // pred_check
          %p1097 = pneg %p299
        $region86: #{tpu_custom_call.1} parent=55 // pred_check_branch
          %1099 = sbr.rel (%p1097) target = $region88
        $region87: #{tpu_custom_call.1} parent=55 // pred_region
          %s1101 = ssub.s32 32, 32
          %1102 = vsyncadd %s1074, %s1101
          %s1103 = smul.addr %s37, 32
          %s1104 = scalar_lea.hbm %s10, %s1103
          %s1106 = sshll.u32 %s1077, 4
          %s1107 = int_to_ptr.vmem [resolvable:$true] %s1106
          %1109 = dma.vmem_to_hbm [thread:$0]  %s1107, 32, %s1104, %s1074
        $region88: #{tpu_custom_call.1} parent=55 // pred_fallthru
          _
      $region56: #{tpu_custom_call.1} parent=5 // pred_fallthru
        _
      %p1110 = scmp.le.s32.totalorder 2, %s27
      // Predicated region
      $region89: #{tpu_custom_call.1} parent=5 // pred_check
        %p1111 = pneg %p1110
      $region90: #{tpu_custom_call.1} parent=5 // pred_check_branch
        %1113 = sbr.rel (%p1111) target = $region92
      $region91: #{tpu_custom_call.1} parent=5 // pred_region
        %s1114 = ssub.s32 %s27, 2
        // Predicated region
        $region93: #{tpu_custom_call.1} parent=91 // pred_check
          %p1115 = pneg %p279
        $region94: #{tpu_custom_call.1} parent=91 // pred_check_branch
          %1117 = sbr.rel (%p1115) target = $region96
        $region95: #{tpu_custom_call.1} parent=91 // pred_region
          %s1118 = sand.u32 %s264, 1
          %s1119 = scalar_lea.sflag [#allocation8], %s1118
          %s1120 = sand.u32 %s264, 1
          %s1121 = smul.addr %s1120, 64
          %s1122 = scalar_lea.vmem [#allocation11], %s1121
          %1123 = dma.done %s1119, 1024
        $region96: #{tpu_custom_call.1} parent=91 // pred_fallthru
          _
        // Predicated region
        $region97: #{tpu_custom_call.1} parent=91 // pred_check
          %p1124 = pneg %p305
        $region98: #{tpu_custom_call.1} parent=91 // pred_check_branch
          %1126 = sbr.rel (%p1124) target = $region100
        $region99: #{tpu_custom_call.1} parent=91 // pred_region
          %s1127 = sand.u32 %s290, 1
          %s1128 = scalar_lea.sflag [#allocation13], %s1127
          %s1129 = sand.u32 %s290, 1
          %s1130 = smul.addr %s1129, 2
          %s1131 = scalar_lea.vmem [#allocation12], %s1130
          %1132 = dma.done %s1128, 32
        $region100: #{tpu_custom_call.1} parent=91 // pred_fallthru
          _
      $region92: #{tpu_custom_call.1} parent=5 // pred_fallthru
        _
    $region6: #{tpu_custom_call.1} parent=1 // loop_footer
      %s31 = sadd.s32 1, %s27
    $region7: #{tpu_custom_call.1} parent=1 // loop_footer_branch
      %26 = sbr.rel target = $region3
    $region8: #{tpu_custom_call.1} parent=1 // loop_exit
      _
    %1133 = vsyncpa [#allocation7], 1
    %s1134 = scalar_lea.sflag [#allocation7], 1
    %1135 = vsyncpa %s1134, 1
    %1136 = vsyncpa [#allocation10], 1
    %1137 = vsyncpa [#allocation8], 1
    %s1138 = scalar_lea.sflag [#allocation8], 1
    %1139 = vsyncpa %s1138, 1
    %1140 = vsyncpa [#allocation13], 1
    %s1141 = scalar_lea.sflag [#allocation13], 1
    %1142 = vsyncpa %s1141, 1

</llo_original>
